<compile_context>
chip_gen: v7x
topology: tpu7x:2x2x1
jax: 0.10.0
libtpu: 0.0.40
codegen_flags: <defaults>
</compile_context>

<pallas_src>
import functools

import jax
import jax.numpy as jnp
from jax.experimental import pallas as pl
from jax.experimental.pallas import tpu as pltpu

BN_EPS = 1e-5


def _hw_budget():
    """(matmul tile-row target, vmem limit) adapted to the chip's VMEM size."""
    try:
        vmem = int(pltpu.get_tpu_info().vmem_capacity_bytes)
    except Exception:  # query unavailable -> conservative defaults
        return 1024, 32 * 1024 * 1024
    if vmem >= 96 * 1024 * 1024:          # v5e / v6e: 128 MiB physical VMEM
        return 2048, 64 * 1024 * 1024
    return 1024, 32 * 1024 * 1024          # v7x: 64 MiB physical VMEM


_TILE_M_TARGET, _VMEM_LIMIT_BYTES = _hw_budget()
# The standalone elementwise pass (last layer only) has a tiny per-tile
# footprint, so amortize the per-grid-step overhead with bigger tiles.
_TILE_M_ELEMWISE = 4096


def _pick_tile_m(m, target):
    """Largest sublane-friendly divisor of m that is <= target (else m)."""
    if m <= target:
        return m
    for step in (16, 8):
        t = (target // step) * step
        while t >= step:
            if m % t == 0:
                return t
            t -= step
    # TODO(synk): add a padded-tile (masked-stats) path for awkward M instead
    # of falling back to one whole-array block.
    return m


def _pick_pack(m, k, cout):
    """Row-pack factor P: P consecutive patch rows share one array row so both
    the kernel input (P*K lanes) and output (P*Cout lanes) are lane-dense.
    Output pack equals input pack because the matmul weight is block-diagonal."""
    p = 1
    while p < 16 and m % (2 * p) == 0 and ((p * cout) % 128 != 0 or p * k < 96):
        p *= 2
    return p


def _block_diag_weight(wmat, pack):
    """[K, Cout] -> block-diag [P*K, P*Cout]: a row-packed A tile then yields a
    row-packed (lane-dense) output from one MXU matmul with no in-kernel
    relayout. The zero blocks only cost MXU time, which has large slack."""
    if pack == 1:
        return wmat
    k, cout = wmat.shape
    eye = jnp.eye(pack, dtype=wmat.dtype)
    w = eye[:, None, :, None] * wmat[None, :, None, :]        # [P, K, P, Cout]
    return w.reshape(pack * k, pack * cout)


# ----------------------------- Pallas kernels ------------------------------ #
def _matmul_and_stats(a, w_ref, y_ref, stats_ref):
    """Shared tail: MXU matmul (f32 accumulation) + per-tile column statistics
    (rows 0/1 of the 8-sublane stats tile hold sum / sum-of-squares)."""
    y = jnp.dot(a, w_ref[...], preferred_element_type=jnp.float32)
    y_ref[...] = y.astype(y_ref.dtype)
    col_sum = jnp.sum(y, axis=0, keepdims=True)
    col_sumsq = jnp.sum(y * y, axis=0, keepdims=True)
    rid = jax.lax.broadcasted_iota(jnp.int32, stats_ref.shape, 0)
    stats_ref[...] = (
        jnp.where(rid == 0, jnp.broadcast_to(col_sum, stats_ref.shape), 0.0)
        + jnp.where(rid == 1, jnp.broadcast_to(col_sumsq, stats_ref.shape), 0.0)
    )


def matmul_stats_kernel(a_ref, w_ref, y_ref, stats_ref):
    """First layer: conv-as-matmul on raw input patches + BN statistics."""
    _matmul_and_stats(a_ref[...], w_ref, y_ref, stats_ref)


def bn_relu_matmul_stats_kernel(a_ref, scale_ref, shift_ref, w_ref, y_ref, stats_ref):
    """Fused layer: the PREVIOUS layer's BatchNorm (per patch-column scale and
    shift) + ReLU is applied to the pre-BN patch tile, then this layer's
    conv-as-matmul + BN statistics.  Removes the standalone elementwise pass
    (one full HBM read+write of the activation) for every non-final layer."""
    a = a_ref[...].astype(jnp.float32)
    a = jnp.maximum(a * scale_ref[...] + shift_ref[...], 0.0)
    _matmul_and_stats(a.astype(jnp.bfloat16), w_ref, y_ref, stats_ref)


def bn_relu_kernel(y_ref, scale_ref, shift_ref, o_ref):
    """Last layer only: out = relu(y * scale + shift); lane-dense elementwise."""
    y = y_ref[...].astype(jnp.float32)
    o_ref[...] = jnp.maximum(y * scale_ref[...] + shift_ref[...], 0.0).astype(o_ref.dtype)


# ------------------------------ JAX wrappers -------------------------------- #
def conv_matmul(a_packed, w_packed, scale_cols=None, shift_cols=None):
    """Tiled conv-as-matmul (+ optional fused previous-layer BN/ReLU) with
    per-tile BatchNorm partial statistics."""
    ma, ka = a_packed.shape
    pc = w_packed.shape[1]
    tile_m = _pick_tile_m(ma, _TILE_M_TARGET)
    n_tiles = ma // tile_m
    fused = scale_cols is not None

    in_specs = [pl.BlockSpec((tile_m, ka), lambda i: (i, 0))]
    operands = [a_packed]
    if fused:
        in_specs += [pl.BlockSpec((1, ka), lambda i: (0, 0)),
                     pl.BlockSpec((1, ka), lambda i: (0, 0))]
        operands += [scale_cols, shift_cols]
    in_specs.append(pl.BlockSpec((ka, pc), lambda i: (0, 0)))
    operands.append(w_packed)

    kernel = bn_relu_matmul_stats_kernel if fused else matmul_stats_kernel

    y, stats = pl.pallas_call(
        kernel,
        out_shape=(
            jax.ShapeDtypeStruct((ma, pc), jnp.bfloat16),
            jax.ShapeDtypeStruct((n_tiles * 8, pc), jnp.float32),
        ),
        grid_spec=pltpu.PrefetchScalarGridSpec(
            num_scalar_prefetch=0,
            grid=(n_tiles,),
            in_specs=in_specs,
            out_specs=[
                pl.BlockSpec((tile_m, pc), lambda i: (i, 0)),
                pl.BlockSpec((8, pc), lambda i: (i, 0)),
            ],
        ),
        compiler_params=pltpu.CompilerParams(
            # Per-tile partial statistics -> no resident accumulator -> the M
            # axis is "parallel" (shards across v7x's two TensorCores).
            dimension_semantics=("parallel",),
            vmem_limit_bytes=_VMEM_LIMIT_BYTES,
        ),
        cost_estimate=pl.CostEstimate(
            flops=int(2 * ma * ka * pc),
            transcendentals=0,
            bytes_accessed=int(2 * ma * ka + 2 * ka * pc + 2 * ma * pc
                               + 4 * n_tiles * 8 * pc),
        ),
    )(*operands)
    return y, stats


def bn_relu(y_packed, scale_c, shift_c):
    """Standalone BatchNorm+ReLU (last layer only), lane-dense elementwise."""
    ma, pc = y_packed.shape
    rep = pc // scale_c.shape[0]
    scale_cols = jnp.tile(scale_c, rep)[None, :]
    shift_cols = jnp.tile(shift_c, rep)[None, :]
    tile_m = _pick_tile_m(ma, _TILE_M_ELEMWISE)
    return pl.pallas_call(
        bn_relu_kernel,
        out_shape=jax.ShapeDtypeStruct((ma, pc), jnp.float32),
        grid_spec=pltpu.PrefetchScalarGridSpec(
            num_scalar_prefetch=0,
            grid=(ma // tile_m,),
            in_specs=[pl.BlockSpec((tile_m, pc), lambda i: (i, 0)),
                      pl.BlockSpec((1, pc), lambda i: (0, 0)),
                      pl.BlockSpec((1, pc), lambda i: (0, 0))],
            out_specs=pl.BlockSpec((tile_m, pc), lambda i: (i, 0)),
        ),
        compiler_params=pltpu.CompilerParams(
            dimension_semantics=("parallel",),
            vmem_limit_bytes=_VMEM_LIMIT_BYTES,
        ),
    )(y_packed, scale_cols, shift_cols)


def _bn_params(stats, pack, cout, m_rows, gamma, beta):
    """Reduce per-tile partial sums into BatchNorm2d (training-mode) affine."""
    n_tiles = stats.shape[0] // 8
    per_tile = stats.reshape(n_tiles, 8, pack * cout)
    ch_sum = per_tile[:, 0, :].sum(axis=0).reshape(pack, cout).sum(axis=0)
    ch_sumsq = per_tile[:, 1, :].sum(axis=0).reshape(pack, cout).sum(axis=0)
    inv_m = 1.0 / m_rows
    mean = ch_sum * inv_m
    # TODO(synk): single-pass E[y^2]-E[y]^2 can cancel for large means; switch
    # to a two-pass/Welford variance if bit-close PyTorch parity is required.
    var = jnp.maximum(ch_sumsq * inv_m - mean * mean, 0.0)
    rstd = jax.lax.rsqrt(var + BN_EPS)
    scale = gamma.astype(jnp.float32) * rstd
    shift = beta.astype(jnp.float32) - mean * scale
    return scale, shift            # per-channel f32 vectors [Cout]


def _patches_3x3(x, kernel, stride, pad):
    """im2col patch tensor [N, Ho, Wo, K] for the 3x3/pad-1 first layer
    (Cin is tiny so this stays cheap); tap order (kh, kw, cin)."""
    n, h, w, c = x.shape
    xp = jnp.pad(x, ((0, 0), (pad, pad), (pad, pad), (0, 0)))
    ho = (h + 2 * pad - kernel) // stride + 1
    wo = (w + 2 * pad - kernel) // stride + 1
    cols = []
    for kh in range(kernel):
        for kw in range(kernel):
            cols.append(xp[:, kh:kh + stride * ho:stride, kw:kw + stride * wo:stride, :])
    return jnp.concatenate(cols, axis=-1), ho, wo


def _patches_2x2_s2(y_nhwc):
    """2x2/stride-2 patch tensor [N, Ho, Wo, 4C]: pure space-to-depth
    permutation of the previous layer's pre-BN output; tap order (kh, kw, c)."""
    # TODO(synk): fold this permutation into the consuming kernel (tap-sliced
    # BlockSpecs) to remove one XLA read+write of the activation per layer.
    n, h, w, c = y_nhwc.shape
    ho, wo = h // 2, w // 2
    a = y_nhwc.reshape(n, ho, 2, wo, 2, c).transpose(0, 1, 3, 2, 4, 5)
    return a.reshape(n, ho, wo, 4 * c), ho, wo


def build_encoder_specs(color_channels, n_latent_features, input_dim=256):
    """Replicates Encoder.__init__; returns (cin, cout, stride, kernel, pad)."""
    ratio = input_dim // n_latent_features
    specs = []
    start = 1
    if start == ratio:
        specs.append((color_channels, 128, 1, 3, 1))
    else:
        specs.append((color_channels, 64, 1, 3, 1))
    while start < ratio:
        if start * 2 >= ratio:
            specs.append((64, 128, 2, 2, 0))
        else:
            specs.append((64, 64, 2, 2, 0))
        start *= 2
    return specs


def init_encoder_params(key, specs):
    """Deterministic parameter init (shapes per nn.Conv2d / nn.BatchNorm2d)."""
    params = []
    for (cin, cout, _stride, k, _pad) in specs:
        key, k1, k2, k3, k4 = jax.random.split(key, 5)
        fan_in = cin * k * k
        bound = 1.0 / (fan_in ** 0.5)
        w = jax.random.uniform(k1, (cout, cin, k, k), jnp.float32, -bound, bound)
        # Conv bias kept for parameter-layout fidelity; it cancels exactly in
        # the training-mode BatchNorm mean subtraction, so compute drops it.
        b = jax.random.uniform(k2, (cout,), jnp.float32, -bound, bound)
        gamma = jax.random.uniform(k3, (cout,), jnp.float32, 0.5, 1.5)
        beta = 0.1 * jax.random.normal(k4, (cout,), jnp.float32)
        params.append((w, b, gamma, beta))
    return params


def encoder_forward(x_nchw, params, specs):
    """Full Encoder forward. x_nchw: [N, C, H, W] (PyTorch convention)."""
    x = jnp.transpose(x_nchw, (0, 2, 3, 1)).astype(jnp.bfloat16)   # NHWC
    n = x.shape[0]

    prev_y = None            # previous layer's pre-BN conv output (row-packed)
    prev_shape = None        # (Ho, Wo, Cout) of prev_y
    prev_scale = prev_shift = None   # previous layer's per-channel BN affine

    for (cin, cout, stride, kernel, pad), (wconv, _b, gamma, beta) in zip(specs, params):
        scale_cols = shift_cols = None
        if prev_y is None:
            patches, ho, wo = _patches_3x3(x, kernel, stride, pad)
        else:
            ph, pw, cprev = prev_shape
            y_nhwc = prev_y.reshape(n, ph, pw, cprev)
            patches, ho, wo = _patches_2x2_s2(y_nhwc)

        k = cin * kernel * kernel
        m = n * ho * wo
        pack = _pick_pack(m, k, cout)
        a_packed = patches.reshape(m // pack, pack * k)

        if prev_y is not None:
            reps = a_packed.shape[1] // prev_shape[2]
            scale_cols = jnp.tile(prev_scale, reps)[None, :]
            shift_cols = jnp.tile(prev_shift, reps)[None, :]

        # [Cout, Cin, kh, kw] -> [K, Cout] matching (kh, kw, cin) tap order,
        # then block-diag expanded to keep the packed output lane-dense.
        wmat = jnp.transpose(wconv, (2, 3, 1, 0)).reshape(k, cout).astype(jnp.bfloat16)
        w_packed = _block_diag_weight(wmat, pack)

        y, stats = conv_matmul(a_packed, w_packed, scale_cols, shift_cols)
        scale_c, shift_c = _bn_params(stats, pack, cout, m, gamma, beta)

        prev_y, prev_shape = y, (ho, wo, cout)
        prev_scale, prev_shift = scale_c, shift_c

    # Only the last layer still needs a standalone BatchNorm+ReLU pass.
    ho, wo, cout = prev_shape
    out = bn_relu(prev_y, prev_scale, prev_shift)
    out_nhwc = out.reshape(n, ho, wo, cout)
    # TODO(synk): fuse this NHWC->NCHW flatten into the final pass's out_spec
    # (in-tile XLU transpose) to save one read+write of the final activation.
    out_nchw = jnp.transpose(out_nhwc, (0, 3, 1, 2))
    return out_nchw.reshape(n, -1)


# --------------------------------- main ------------------------------------ #
if __name__ == "__main__":
    color_channels = 3
    n_latent_features = 64     # ratio 256 // 64 = 4 -> 3 encoder layers
    N, H, W = 2, 8, 8

    specs = build_encoder_specs(color_channels, n_latent_features)

    key = jax.random.PRNGKey(0)
    key, kx, kp = jax.random.split(key, 3)
    x = jax.random.normal(kx, (N, color_channels, H, W), jnp.float32)
    params = init_encoder_params(kp, specs)

    fwd = jax.jit(functools.partial(encoder_forward, specs=specs))
    out = fwd(x, params)
    jax.block_until_ready(out)

    # sanity: [2, 128 * (8//4) * (8//4)] = [2, 512]
    assert out.shape == (N, 128 * (H // 4) * (W // 4)), out.shape
    assert out.dtype == jnp.float32
    assert bool(jnp.all(jnp.isfinite(out)))
    assert bool(jnp.all(out >= 0.0))   # ReLU output

    print("KERNEL_OK")
</pallas_src>

<mosaic_0001>
module attributes {stable_mosaic.version = 11 : i64} {
  func.func @matmul_stats_kernel(%arg0: i32, %arg1: memref<32x108xbf16, #tpu.memory_space<vmem>>, %arg2: memref<108x256xbf16, #tpu.memory_space<vmem>>, %arg3: memref<32x256xbf16, #tpu.memory_space<vmem>>, %arg4: memref<8x256xf32, #tpu.memory_space<vmem>>) attributes {dimension_semantics = [#tpu.dimension_semantics<parallel>], iteration_bounds = array<i64: 1>, scalar_prefetch = 0 : i64, scratch_operands = 0 : i64, tpu.core_type = #tpu.core_type<tc>, window_params = [{transform_indices = @transform_0, window_bounds = array<i64: 32, 108>}, {pipeline_mode = #tpu.pipeline_mode<synchronous>, transform_indices = @transform_1, window_bounds = array<i64: 108, 256>}, {transform_indices = @transform_2, window_bounds = array<i64: 32, 256>}, {transform_indices = @transform_3, window_bounds = array<i64: 8, 256>}]} {
    %c0 = arith.constant 0 : index
    %c0_0 = arith.constant 0 : index
    %0 = vector.load %arg1[%c0, %c0_0] : memref<32x108xbf16, #tpu.memory_space<vmem>>, vector<32x108xbf16>
    %c0_1 = arith.constant 0 : index
    %c0_2 = arith.constant 0 : index
    %1 = vector.load %arg2[%c0_1, %c0_2] : memref<108x256xbf16, #tpu.memory_space<vmem>>, vector<108x256xbf16>
    %cst = arith.constant dense<0.000000e+00> : vector<32x256xf32>
    %2 = tpu.matmul %0, %1, %cst {dimension_numbers = #tpu.dot_dimension_numbers<[1], [0], [0], [1], [0, 0, 1, 1], [], []>} : vector<32x108xbf16>, vector<108x256xbf16>, vector<32x256xf32> -> vector<32x256xf32>
    %3 = arith.truncf %2 : vector<32x256xf32> to vector<32x256xbf16>
    %c0_3 = arith.constant 0 : index
    %c0_4 = arith.constant 0 : index
    %4 = vector.load %arg3[%c0_3, %c0_4] : memref<32x256xbf16, #tpu.memory_space<vmem>>, vector<32x256xbf16>
    tpu.vector_store %arg3[%c0_3, %c0_4], %3 {strides = array<i32>} : memref<32x256xbf16, #tpu.memory_space<vmem>>, vector<32x256xbf16>,
    %cst_5 = arith.constant dense<0.000000e+00> : vector<256xf32>
    %5 = vector.multi_reduction <add>, %2, %cst_5 [0] : vector<32x256xf32> to vector<256xf32>
    %6 = vector.shape_cast %5 : vector<256xf32> to vector<1x256xf32>
    %7 = arith.mulf %2, %2 : vector<32x256xf32>
    %cst_6 = arith.constant dense<0.000000e+00> : vector<256xf32>
    %8 = vector.multi_reduction <add>, %7, %cst_6 [0] : vector<32x256xf32> to vector<256xf32>
    %9 = vector.shape_cast %8 : vector<256xf32> to vector<1x256xf32>
    %10 = tpu.iota {dimensions = array<i32: 0>} : vector<8x256xi32>
    %c0_i32 = arith.constant 0 : i32
    %11 = vector.broadcast %c0_i32 : i32 to vector<8x256xi32>
    %12 = arith.cmpi eq, %10, %11 : vector<8x256xi32>
    %13 = vector.shape_cast %6 : vector<1x256xf32> to vector<1x256xf32>
    %14 = vector.broadcast %13 : vector<1x256xf32> to vector<8x256xf32>
    %cst_7 = arith.constant 0.000000e+00 : f32
    %15 = vector.broadcast %cst_7 : f32 to vector<8x256xf32>
    %16 = arith.select %12, %14, %15 : vector<8x256xi1>, vector<8x256xf32>
    %c1_i32 = arith.constant 1 : i32
    %17 = vector.broadcast %c1_i32 : i32 to vector<8x256xi32>
    %18 = arith.cmpi eq, %10, %17 : vector<8x256xi32>
    %19 = vector.shape_cast %9 : vector<1x256xf32> to vector<1x256xf32>
    %20 = vector.broadcast %19 : vector<1x256xf32> to vector<8x256xf32>
    %cst_8 = arith.constant 0.000000e+00 : f32
    %21 = vector.broadcast %cst_8 : f32 to vector<8x256xf32>
    %22 = arith.select %18, %20, %21 : vector<8x256xi1>, vector<8x256xf32>
    %23 = arith.addf %16, %22 : vector<8x256xf32>
    %c0_9 = arith.constant 0 : index
    %c0_10 = arith.constant 0 : index
    %24 = vector.load %arg4[%c0_9, %c0_10] : memref<8x256xf32, #tpu.memory_space<vmem>>, vector<8x256xf32>
    tpu.vector_store %arg4[%c0_9, %c0_10], %23 {strides = array<i32>} : memref<8x256xf32, #tpu.memory_space<vmem>>, vector<8x256xf32>,
    return
  }
  func.func @transform_0(%arg0: i32) -> (i32, i32) {
    %c0_i32 = arith.constant 0 : i32
    %c0_i32_0 = arith.constant 0 : i32
    return %arg0, %c0_i32 : i32, i32
  }
  func.func @transform_1(%arg0: i32) -> (i32, i32) {
    %c0_i32 = arith.constant 0 : i32
    %c0_i32_0 = arith.constant 0 : i32
    %c0_i32_1 = arith.constant 0 : i32
    return %c0_i32, %c0_i32_0 : i32, i32
  }
  func.func @transform_2(%arg0: i32) -> (i32, i32) {
    %c0_i32 = arith.constant 0 : i32
    %c0_i32_0 = arith.constant 0 : i32
    return %arg0, %c0_i32 : i32, i32
  }
  func.func @transform_3(%arg0: i32) -> (i32, i32) {
    %c0_i32 = arith.constant 0 : i32
    %c0_i32_0 = arith.constant 0 : i32
    return %arg0, %c0_i32 : i32, i32
  }
}

module attributes {stable_mosaic.version = 11 : i64} {
  func.func @bn_relu_matmul_stats_kernel(%arg0: i32, %arg1: memref<16x512xbf16, #tpu.memory_space<vmem>>, %arg2: memref<1x512xf32, #tpu.memory_space<vmem>>, %arg3: memref<1x512xf32, #tpu.memory_space<vmem>>, %arg4: memref<512x128xbf16, #tpu.memory_space<vmem>>, %arg5: memref<16x128xbf16, #tpu.memory_space<vmem>>, %arg6: memref<8x128xf32, #tpu.memory_space<vmem>>) attributes {dimension_semantics = [#tpu.dimension_semantics<parallel>], iteration_bounds = array<i64: 1>, scalar_prefetch = 0 : i64, scratch_operands = 0 : i64, tpu.core_type = #tpu.core_type<tc>, window_params = [{transform_indices = @transform_0, window_bounds = array<i64: 16, 512>}, {pipeline_mode = #tpu.pipeline_mode<synchronous>, transform_indices = @transform_1, window_bounds = array<i64: 1, 512>}, {pipeline_mode = #tpu.pipeline_mode<synchronous>, transform_indices = @transform_2, window_bounds = array<i64: 1, 512>}, {pipeline_mode = #tpu.pipeline_mode<synchronous>, transform_indices = @transform_3, window_bounds = array<i64: 512, 128>}, {transform_indices = @transform_4, window_bounds = array<i64: 16, 128>}, {transform_indices = @transform_5, window_bounds = array<i64: 8, 128>}]} {
    %c0 = arith.constant 0 : index
    %c0_0 = arith.constant 0 : index
    %0 = vector.load %arg1[%c0, %c0_0] : memref<16x512xbf16, #tpu.memory_space<vmem>>, vector<16x512xbf16>
    %1 = arith.extf %0 : vector<16x512xbf16> to vector<16x512xf32>
    %c0_1 = arith.constant 0 : index
    %c0_2 = arith.constant 0 : index
    %2 = vector.load %arg2[%c0_1, %c0_2] : memref<1x512xf32, #tpu.memory_space<vmem>>, vector<1x512xf32>
    %3 = vector.broadcast %2 : vector<1x512xf32> to vector<16x512xf32>
    %4 = arith.mulf %1, %3 : vector<16x512xf32>
    %c0_3 = arith.constant 0 : index
    %c0_4 = arith.constant 0 : index
    %5 = vector.load %arg3[%c0_3, %c0_4] : memref<1x512xf32, #tpu.memory_space<vmem>>, vector<1x512xf32>
    %6 = vector.broadcast %5 : vector<1x512xf32> to vector<16x512xf32>
    %7 = arith.addf %4, %6 : vector<16x512xf32>
    %cst = arith.constant 0.000000e+00 : f32
    %8 = vector.broadcast %cst : f32 to vector<16x512xf32>
    %9 = arith.maximumf %7, %8 : vector<16x512xf32>
    %10 = arith.truncf %9 : vector<16x512xf32> to vector<16x512xbf16>
    %c0_5 = arith.constant 0 : index
    %c0_6 = arith.constant 0 : index
    %11 = vector.load %arg4[%c0_5, %c0_6] : memref<512x128xbf16, #tpu.memory_space<vmem>>, vector<512x128xbf16>
    %cst_7 = arith.constant dense<0.000000e+00> : vector<16x128xf32>
    %12 = tpu.matmul %10, %11, %cst_7 {dimension_numbers = #tpu.dot_dimension_numbers<[1], [0], [0], [1], [0, 0, 1, 1], [], []>} : vector<16x512xbf16>, vector<512x128xbf16>, vector<16x128xf32> -> vector<16x128xf32>
    %13 = arith.truncf %12 : vector<16x128xf32> to vector<16x128xbf16>
    %c0_8 = arith.constant 0 : index
    %c0_9 = arith.constant 0 : index
    %14 = vector.load %arg5[%c0_8, %c0_9] : memref<16x128xbf16, #tpu.memory_space<vmem>>, vector<16x128xbf16>
    tpu.vector_store %arg5[%c0_8, %c0_9], %13 {strides = array<i32>} : memref<16x128xbf16, #tpu.memory_space<vmem>>, vector<16x128xbf16>,
    %cst_10 = arith.constant dense<0.000000e+00> : vector<128xf32>
    %15 = vector.multi_reduction <add>, %12, %cst_10 [0] : vector<16x128xf32> to vector<128xf32>
    %16 = vector.shape_cast %15 : vector<128xf32> to vector<1x128xf32>
    %17 = arith.mulf %12, %12 : vector<16x128xf32>
    %cst_11 = arith.constant dense<0.000000e+00> : vector<128xf32>
    %18 = vector.multi_reduction <add>, %17, %cst_11 [0] : vector<16x128xf32> to vector<128xf32>
    %19 = vector.shape_cast %18 : vector<128xf32> to vector<1x128xf32>
    %20 = tpu.iota {dimensions = array<i32: 0>} : vector<8x128xi32>
    %c0_i32 = arith.constant 0 : i32
    %21 = vector.broadcast %c0_i32 : i32 to vector<8x128xi32>
    %22 = arith.cmpi eq, %20, %21 : vector<8x128xi32>
    %23 = vector.shape_cast %16 : vector<1x128xf32> to vector<1x128xf32>
    %24 = vector.broadcast %23 : vector<1x128xf32> to vector<8x128xf32>
    %cst_12 = arith.constant 0.000000e+00 : f32
    %25 = vector.broadcast %cst_12 : f32 to vector<8x128xf32>
    %26 = arith.select %22, %24, %25 : vector<8x128xi1>, vector<8x128xf32>
    %c1_i32 = arith.constant 1 : i32
    %27 = vector.broadcast %c1_i32 : i32 to vector<8x128xi32>
    %28 = arith.cmpi eq, %20, %27 : vector<8x128xi32>
    %29 = vector.shape_cast %19 : vector<1x128xf32> to vector<1x128xf32>
    %30 = vector.broadcast %29 : vector<1x128xf32> to vector<8x128xf32>
    %cst_13 = arith.constant 0.000000e+00 : f32
    %31 = vector.broadcast %cst_13 : f32 to vector<8x128xf32>
    %32 = arith.select %28, %30, %31 : vector<8x128xi1>, vector<8x128xf32>
    %33 = arith.addf %26, %32 : vector<8x128xf32>
    %c0_14 = arith.constant 0 : index
    %c0_15 = arith.constant 0 : index
    %34 = vector.load %arg6[%c0_14, %c0_15] : memref<8x128xf32, #tpu.memory_space<vmem>>, vector<8x128xf32>
    tpu.vector_store %arg6[%c0_14, %c0_15], %33 {strides = array<i32>} : memref<8x128xf32, #tpu.memory_space<vmem>>, vector<8x128xf32>,
    return
  }
  func.func @transform_0(%arg0: i32) -> (i32, i32) {
    %c0_i32 = arith.constant 0 : i32
    %c0_i32_0 = arith.constant 0 : i32
    return %arg0, %c0_i32 : i32, i32
  }
  func.func @transform_1(%arg0: i32) -> (i32, i32) {
    %c0_i32 = arith.constant 0 : i32
    %c0_i32_0 = arith.constant 0 : i32
    %c0_i32_1 = arith.constant 0 : i32
    return %c0_i32, %c0_i32_0 : i32, i32
  }
  func.func @transform_2(%arg0: i32) -> (i32, i32) {
    %c0_i32 = arith.constant 0 : i32
    %c0_i32_0 = arith.constant 0 : i32
    %c0_i32_1 = arith.constant 0 : i32
    return %c0_i32, %c0_i32_0 : i32, i32
  }
  func.func @transform_3(%arg0: i32) -> (i32, i32) {
    %c0_i32 = arith.constant 0 : i32
    %c0_i32_0 = arith.constant 0 : i32
    %c0_i32_1 = arith.constant 0 : i32
    return %c0_i32, %c0_i32_0 : i32, i32
  }
  func.func @transform_4(%arg0: i32) -> (i32, i32) {
    %c0_i32 = arith.constant 0 : i32
    %c0_i32_0 = arith.constant 0 : i32
    return %arg0, %c0_i32 : i32, i32
  }
  func.func @transform_5(%arg0: i32) -> (i32, i32) {
    %c0_i32 = arith.constant 0 : i32
    %c0_i32_0 = arith.constant 0 : i32
    return %arg0, %c0_i32 : i32, i32
  }
}

module attributes {stable_mosaic.version = 11 : i64} {
  func.func @bn_relu_kernel(%arg0: i32, %arg1: memref<8x128xbf16, #tpu.memory_space<vmem>>, %arg2: memref<1x128xf32, #tpu.memory_space<vmem>>, %arg3: memref<1x128xf32, #tpu.memory_space<vmem>>, %arg4: memref<8x128xf32, #tpu.memory_space<vmem>>) attributes {dimension_semantics = [#tpu.dimension_semantics<parallel>], iteration_bounds = array<i64: 1>, scalar_prefetch = 0 : i64, scratch_operands = 0 : i64, tpu.core_type = #tpu.core_type<tc>, window_params = [{transform_indices = @transform_0, window_bounds = array<i64: 8, 128>}, {pipeline_mode = #tpu.pipeline_mode<synchronous>, transform_indices = @transform_1, window_bounds = array<i64: 1, 128>}, {pipeline_mode = #tpu.pipeline_mode<synchronous>, transform_indices = @transform_2, window_bounds = array<i64: 1, 128>}, {transform_indices = @transform_3, window_bounds = array<i64: 8, 128>}]} {
    %c0 = arith.constant 0 : index
    %c0_0 = arith.constant 0 : index
    %0 = vector.load %arg1[%c0, %c0_0] : memref<8x128xbf16, #tpu.memory_space<vmem>>, vector<8x128xbf16>
    %1 = arith.extf %0 : vector<8x128xbf16> to vector<8x128xf32>
    %c0_1 = arith.constant 0 : index
    %c0_2 = arith.constant 0 : index
    %2 = vector.load %arg2[%c0_1, %c0_2] : memref<1x128xf32, #tpu.memory_space<vmem>>, vector<1x128xf32>
    %3 = vector.broadcast %2 : vector<1x128xf32> to vector<8x128xf32>
    %4 = arith.mulf %1, %3 : vector<8x128xf32>
    %c0_3 = arith.constant 0 : index
    %c0_4 = arith.constant 0 : index
    %5 = vector.load %arg3[%c0_3, %c0_4] : memref<1x128xf32, #tpu.memory_space<vmem>>, vector<1x128xf32>
    %6 = vector.broadcast %5 : vector<1x128xf32> to vector<8x128xf32>
    %7 = arith.addf %4, %6 : vector<8x128xf32>
    %cst = arith.constant 0.000000e+00 : f32
    %8 = vector.broadcast %cst : f32 to vector<8x128xf32>
    %9 = arith.maximumf %7, %8 : vector<8x128xf32>
    %c0_5 = arith.constant 0 : index
    %c0_6 = arith.constant 0 : index
    %10 = vector.load %arg4[%c0_5, %c0_6] : memref<8x128xf32, #tpu.memory_space<vmem>>, vector<8x128xf32>
    tpu.vector_store %arg4[%c0_5, %c0_6], %9 {strides = array<i32>} : memref<8x128xf32, #tpu.memory_space<vmem>>, vector<8x128xf32>,
    return
  }
  func.func @transform_0(%arg0: i32) -> (i32, i32) {
    %c0_i32 = arith.constant 0 : i32
    %c0_i32_0 = arith.constant 0 : i32
    return %arg0, %c0_i32 : i32, i32
  }
  func.func @transform_1(%arg0: i32) -> (i32, i32) {
    %c0_i32 = arith.constant 0 : i32
    %c0_i32_0 = arith.constant 0 : i32
    %c0_i32_1 = arith.constant 0 : i32
    return %c0_i32, %c0_i32_0 : i32, i32
  }
  func.func @transform_2(%arg0: i32) -> (i32, i32) {
    %c0_i32 = arith.constant 0 : i32
    %c0_i32_0 = arith.constant 0 : i32
    %c0_i32_1 = arith.constant 0 : i32
    return %c0_i32, %c0_i32_0 : i32, i32
  }
  func.func @transform_3(%arg0: i32) -> (i32, i32) {
    %c0_i32 = arith.constant 0 : i32
    %c0_i32_0 = arith.constant 0 : i32
    return %arg0, %c0_i32 : i32, i32
  }
}

module attributes {stable_mosaic.version = 11 : i64} {
  func.func @bn_relu_matmul_stats_kernel(%arg0: i32, %arg1: memref<8x256xbf16, #tpu.memory_space<vmem>>, %arg2: memref<1x256xf32, #tpu.memory_space<vmem>>, %arg3: memref<1x256xf32, #tpu.memory_space<vmem>>, %arg4: memref<256x128xbf16, #tpu.memory_space<vmem>>, %arg5: memref<8x128xbf16, #tpu.memory_space<vmem>>, %arg6: memref<8x128xf32, #tpu.memory_space<vmem>>) attributes {dimension_semantics = [#tpu.dimension_semantics<parallel>], iteration_bounds = array<i64: 1>, scalar_prefetch = 0 : i64, scratch_operands = 0 : i64, tpu.core_type = #tpu.core_type<tc>, window_params = [{transform_indices = @transform_0, window_bounds = array<i64: 8, 256>}, {pipeline_mode = #tpu.pipeline_mode<synchronous>, transform_indices = @transform_1, window_bounds = array<i64: 1, 256>}, {pipeline_mode = #tpu.pipeline_mode<synchronous>, transform_indices = @transform_2, window_bounds = array<i64: 1, 256>}, {pipeline_mode = #tpu.pipeline_mode<synchronous>, transform_indices = @transform_3, window_bounds = array<i64: 256, 128>}, {transform_indices = @transform_4, window_bounds = array<i64: 8, 128>}, {transform_indices = @transform_5, window_bounds = array<i64: 8, 128>}]} {
    %c0 = arith.constant 0 : index
    %c0_0 = arith.constant 0 : index
    %0 = vector.load %arg1[%c0, %c0_0] : memref<8x256xbf16, #tpu.memory_space<vmem>>, vector<8x256xbf16>
    %1 = arith.extf %0 : vector<8x256xbf16> to vector<8x256xf32>
    %c0_1 = arith.constant 0 : index
    %c0_2 = arith.constant 0 : index
    %2 = vector.load %arg2[%c0_1, %c0_2] : memref<1x256xf32, #tpu.memory_space<vmem>>, vector<1x256xf32>
    %3 = vector.broadcast %2 : vector<1x256xf32> to vector<8x256xf32>
    %4 = arith.mulf %1, %3 : vector<8x256xf32>
    %c0_3 = arith.constant 0 : index
    %c0_4 = arith.constant 0 : index
    %5 = vector.load %arg3[%c0_3, %c0_4] : memref<1x256xf32, #tpu.memory_space<vmem>>, vector<1x256xf32>
    %6 = vector.broadcast %5 : vector<1x256xf32> to vector<8x256xf32>
    %7 = arith.addf %4, %6 : vector<8x256xf32>
    %cst = arith.constant 0.000000e+00 : f32
    %8 = vector.broadcast %cst : f32 to vector<8x256xf32>
    %9 = arith.maximumf %7, %8 : vector<8x256xf32>
    %10 = arith.truncf %9 : vector<8x256xf32> to vector<8x256xbf16>
    %c0_5 = arith.constant 0 : index
    %c0_6 = arith.constant 0 : index
    %11 = vector.load %arg4[%c0_5, %c0_6] : memref<256x128xbf16, #tpu.memory_space<vmem>>, vector<256x128xbf16>
    %cst_7 = arith.constant dense<0.000000e+00> : vector<8x128xf32>
    %12 = tpu.matmul %10, %11, %cst_7 {dimension_numbers = #tpu.dot_dimension_numbers<[1], [0], [0], [1], [0, 0, 1, 1], [], []>} : vector<8x256xbf16>, vector<256x128xbf16>, vector<8x128xf32> -> vector<8x128xf32>
    %13 = arith.truncf %12 : vector<8x128xf32> to vector<8x128xbf16>
    %c0_8 = arith.constant 0 : index
    %c0_9 = arith.constant 0 : index
    %14 = vector.load %arg5[%c0_8, %c0_9] : memref<8x128xbf16, #tpu.memory_space<vmem>>, vector<8x128xbf16>
    tpu.vector_store %arg5[%c0_8, %c0_9], %13 {strides = array<i32>} : memref<8x128xbf16, #tpu.memory_space<vmem>>, vector<8x128xbf16>,
    %cst_10 = arith.constant dense<0.000000e+00> : vector<128xf32>
    %15 = vector.multi_reduction <add>, %12, %cst_10 [0] : vector<8x128xf32> to vector<128xf32>
    %16 = vector.shape_cast %15 : vector<128xf32> to vector<1x128xf32>
    %17 = arith.mulf %12, %12 : vector<8x128xf32>
    %cst_11 = arith.constant dense<0.000000e+00> : vector<128xf32>
    %18 = vector.multi_reduction <add>, %17, %cst_11 [0] : vector<8x128xf32> to vector<128xf32>
    %19 = vector.shape_cast %18 : vector<128xf32> to vector<1x128xf32>
    %20 = tpu.iota {dimensions = array<i32: 0>} : vector<8x128xi32>
    %c0_i32 = arith.constant 0 : i32
    %21 = vector.broadcast %c0_i32 : i32 to vector<8x128xi32>
    %22 = arith.cmpi eq, %20, %21 : vector<8x128xi32>
    %23 = vector.shape_cast %16 : vector<1x128xf32> to vector<1x128xf32>
    %24 = vector.broadcast %23 : vector<1x128xf32> to vector<8x128xf32>
    %cst_12 = arith.constant 0.000000e+00 : f32
    %25 = vector.broadcast %cst_12 : f32 to vector<8x128xf32>
    %26 = arith.select %22, %24, %25 : vector<8x128xi1>, vector<8x128xf32>
    %c1_i32 = arith.constant 1 : i32
    %27 = vector.broadcast %c1_i32 : i32 to vector<8x128xi32>
    %28 = arith.cmpi eq, %20, %27 : vector<8x128xi32>
    %29 = vector.shape_cast %19 : vector<1x128xf32> to vector<1x128xf32>
    %30 = vector.broadcast %29 : vector<1x128xf32> to vector<8x128xf32>
    %cst_13 = arith.constant 0.000000e+00 : f32
    %31 = vector.broadcast %cst_13 : f32 to vector<8x128xf32>
    %32 = arith.select %28, %30, %31 : vector<8x128xi1>, vector<8x128xf32>
    %33 = arith.addf %26, %32 : vector<8x128xf32>
    %c0_14 = arith.constant 0 : index
    %c0_15 = arith.constant 0 : index
    %34 = vector.load %arg6[%c0_14, %c0_15] : memref<8x128xf32, #tpu.memory_space<vmem>>, vector<8x128xf32>
    tpu.vector_store %arg6[%c0_14, %c0_15], %33 {strides = array<i32>} : memref<8x128xf32, #tpu.memory_space<vmem>>, vector<8x128xf32>,
    return
  }
  func.func @transform_0(%arg0: i32) -> (i32, i32) {
    %c0_i32 = arith.constant 0 : i32
    %c0_i32_0 = arith.constant 0 : i32
    return %arg0, %c0_i32 : i32, i32
  }
  func.func @transform_1(%arg0: i32) -> (i32, i32) {
    %c0_i32 = arith.constant 0 : i32
    %c0_i32_0 = arith.constant 0 : i32
    %c0_i32_1 = arith.constant 0 : i32
    return %c0_i32, %c0_i32_0 : i32, i32
  }
  func.func @transform_2(%arg0: i32) -> (i32, i32) {
    %c0_i32 = arith.constant 0 : i32
    %c0_i32_0 = arith.constant 0 : i32
    %c0_i32_1 = arith.constant 0 : i32
    return %c0_i32, %c0_i32_0 : i32, i32
  }
  func.func @transform_3(%arg0: i32) -> (i32, i32) {
    %c0_i32 = arith.constant 0 : i32
    %c0_i32_0 = arith.constant 0 : i32
    %c0_i32_1 = arith.constant 0 : i32
    return %c0_i32, %c0_i32_0 : i32, i32
  }
  func.func @transform_4(%arg0: i32) -> (i32, i32) {
    %c0_i32 = arith.constant 0 : i32
    %c0_i32_0 = arith.constant 0 : i32
    return %arg0, %c0_i32 : i32, i32
  }
  func.func @transform_5(%arg0: i32) -> (i32, i32) {
    %c0_i32 = arith.constant 0 : i32
    %c0_i32_0 = arith.constant 0 : i32
    return %arg0, %c0_i32 : i32, i32
  }
}

</mosaic_0001>

<llo_original>
// kernel: tile.25
$region0: #{tile.25}
  #allocation0 [shape = 's32[1]{0}', space=sflag, size = 0x4, scoped, tag = 'scoped memory for tile.25']
  %s0 = inlined_call_operand.vmem [shape: f32[64], index: 0, kind: input, shape index: {}]
  %s1 = inlined_call_operand.vmem [shape: f32[8,64], index: 1, kind: output, shape index: {}]
  // Predicated region
  $region2: #{tile.25} parent=0 // pred_check
    _
  $region3: #{tile.25} parent=0 // pred_check_branch
    %3 = sbr.rel (0) target = $region5
  $region4: #{tile.25} parent=0 // pred_region
    _
  $region5: #{tile.25} parent=0 // pred_fallthru
    _
  %v4 = vld [vmem:[%s0] ss:$0 sm:$0xff]
  %5 = vst [vmem:[%s1] sm:$0xff] %v4

// kernel: tile.26
$region0: #{tile.26}
  %s0 = inlined_call_operand.vmem [shape: f32[8,64], index: 0, kind: input, shape index: {}]
  %s1 = inlined_call_operand.vmem [shape: f32[1,512], index: 1, kind: output, shape index: {}]
  $region1: #{tile.26} parent=0
    #allocation0 [shape = 'u8[16384]{0}', space=vmem, size = 0x4000, scoped, tag = 'scoped mem for output reshape']
    %v2 = vld [vmem:[%s0] ss:$2 sm:$0xf]
    %vm3 = vcmask 523264
    %4 = vst.msk [vmem:[#allocation0] ss:$8 sm:$0xf] %vm3, %v2
    %s5 = scalar_lea.vmem %s0, 1
    %v6 = vld [vmem:[%s5] ss:$2 sm:$0xf]
    %7 = vrot.lane.b32.xlu0 %v6, 64
    %v8 = vpop.permute.xlu0 %7
    %vm9 = vcmask 1048064
    %10 = vst.msk [vmem:[#allocation0] ss:$8 sm:$0xf] %vm9, %v8
    %s12 = sshllo.u32 0, 1
    %v14 = vld [vmem:[#allocation0] sm:%s12]
    %s15 = sshllo.u32 0, 1
    %16 = vst [vmem:[%s1] sm:%s15] %v14
    %s17 = scalar_lea.vmem [#allocation0], 8
    %v18 = vld [vmem:[%s17] sm:%s12]
    %s19 = sshllo.u32 0, 1
    %s20 = scalar_lea.vmem %s1, 1
    %21 = vst [vmem:[%s20] sm:%s19] %v18
    %s22 = scalar_lea.vmem [#allocation0], 16
    %v23 = vld [vmem:[%s22] sm:%s12]
    %s24 = sshllo.u32 0, 1
    %s25 = smul.addr 1, 2
    %s26 = scalar_lea.vmem %s1, %s25
    %27 = vst [vmem:[%s26] sm:%s24] %v23
    %s28 = scalar_lea.vmem [#allocation0], 24
    %v29 = vld [vmem:[%s28] sm:%s12]
    %s30 = sshllo.u32 0, 1
    %s31 = smul.addr 1, 3
    %s32 = scalar_lea.vmem %s1, %s31
    %33 = vst [vmem:[%s32] sm:%s30] %v29

// kernel: encoder_forward.4
$region0: #{encoder_forward.4}
  #allocation0 [shape = 'u32[]', space=smem, size = 0x4, offset = 0x4, fixed_abs, tag = 'smem constant byte address 0x4 - core index']
  #allocation1 [shape = 'u32[144,128]{1,0:T(1,128)}', space=vmem, size = 0x12000, scoped, tag = 'internal scratch']
  %s0 = inlined_call_operand.vmem [shape: bf16[32,108], index: 0, kind: input, shape index: {}]
  %s1 = inlined_call_operand.vmem [shape: bf16[108,256], index: 1, kind: input, shape index: {}]
  %s2 = inlined_call_operand.vmem [shape: bf16[32,256], index: 2, kind: output, shape index: {0}]
  %s3 = inlined_call_operand.vmem [shape: f32[8,256], index: 3, kind: output, shape index: {1}]
  %4 = xla_tuple %s2, %s3
  %s5 = sld [smem:[#allocation0]]
  $region26: #{encoder_forward.4} parent=0
    _
  %s7 = ssub.s32 1, %s5
  %s8 = scalar_select 0, %s7, %s5
  // Predicated region
  $region2: #{encoder_forward.4} parent=0 // pred_check
    _
  $region3: #{encoder_forward.4} parent=0 // pred_check_branch
    %10 = sbr.rel (0) target = $region5
  $region4: #{encoder_forward.4} parent=0 // pred_region
    _
  $region5: #{encoder_forward.4} parent=0 // pred_fallthru
    _
  // Predicated region
  $region6: #{encoder_forward.4} parent=0 // pred_check
    _
  $region7: #{encoder_forward.4} parent=0 // pred_check_branch
    %12 = sbr.rel (0) target = $region9
  $region8: #{encoder_forward.4} parent=0 // pred_region
    _
  $region9: #{encoder_forward.4} parent=0 // pred_fallthru
    _
  %v14 = vld [vmem:[%s0] sm:$0xf]
  %v15 = vld [vmem:[%s0 + $0x4] sm:$0xf]
  %v16 = vld [vmem:[%s0 + $0x8] sm:$0xf]
  %v17 = vld [vmem:[%s0 + $0xc] sm:$0xf]
  %v18 = vld [vmem:[%s1] sm:$0xff]
  %v19 = vld [vmem:[%s1 + $0x8] sm:$0xff]
  %v20 = vld [vmem:[%s1 + $0x10] sm:$0xff]
  %v21 = vld [vmem:[%s1 + $0x18] sm:$0xff]
  %v22 = vld [vmem:[%s1 + $0x20] sm:$0xff]
  %v23 = vld [vmem:[%s1 + $0x28] sm:$0xff]
  %v24 = vld [vmem:[%s1 + $0x30] sm:$0xff]
  %v25 = vld [vmem:[%s1 + $0x38] sm:$0xff]
  %v26 = vld [vmem:[%s1 + $0x40] sm:$0xff]
  %v27 = vld [vmem:[%s1 + $0x48] sm:$0xff]
  %v28 = vld [vmem:[%s1 + $0x50] sm:$0xff]
  %v29 = vld [vmem:[%s1 + $0x58] sm:$0xff]
  %v30 = vld [vmem:[%s1 + $0x60] sm:$0xff]
  %v31 = vld [vmem:[%s1 + $0x68] sm:$0x33]
  %v36 = vunpack.c.l.b16 %v14
  %v37 = vunpack.c.l.b16 %v15
  %v38 = vunpack.c.l.b16 %v16
  %v39 = vunpack.c.l.b16 %v17
  %v40 = vpack.c.b16 %v37, %v36
  %v41 = vpack.c.b16 %v39, %v38
  %v56 = vunpack.c.l.b16 %v18
  %v57 = vunpack.c.h.b16 %v18
  %v58 = vunpack.c.l.b16 %v19
  %v59 = vunpack.c.h.b16 %v19
  %v60 = vunpack.c.l.b16 %v20
  %v61 = vunpack.c.h.b16 %v20
  %v62 = vunpack.c.l.b16 %v21
  %v63 = vunpack.c.h.b16 %v21
  %v64 = vunpack.c.l.b16 %v22
  %v65 = vunpack.c.h.b16 %v22
  %v66 = vunpack.c.l.b16 %v23
  %v67 = vunpack.c.h.b16 %v23
  %v68 = vunpack.c.l.b16 %v24
  %v69 = vunpack.c.h.b16 %v24
  %v70 = vunpack.c.l.b16 %v25
  %v71 = vunpack.c.h.b16 %v25
  %v72 = vunpack.c.l.b16 %v26
  %v73 = vunpack.c.h.b16 %v26
  %v74 = vunpack.c.l.b16 %v27
  %v75 = vunpack.c.h.b16 %v27
  %v76 = vunpack.c.l.b16 %v28
  %v77 = vunpack.c.h.b16 %v28
  %v78 = vunpack.c.l.b16 %v29
  %v79 = vunpack.c.h.b16 %v29
  %v80 = vunpack.c.l.b16 %v30
  %v81 = vunpack.c.h.b16 %v30
  %v82 = vunpack.c.l.b16 %v31
  %v83 = vunpack.c.h.b16 %v31
  %v84 = vpack.c.b16 %v58, %v56
  %v85 = vpack.c.b16 %v59, %v57
  %v86 = vpack.c.b16 %v62, %v60
  %v87 = vpack.c.b16 %v63, %v61
  %v88 = vpack.c.b16 %v66, %v64
  %v89 = vpack.c.b16 %v67, %v65
  %v90 = vpack.c.b16 %v70, %v68
  %v91 = vpack.c.b16 %v71, %v69
  %v92 = vpack.c.b16 %v74, %v72
  %v93 = vpack.c.b16 %v75, %v73
  %v94 = vpack.c.b16 %v78, %v76
  %v95 = vpack.c.b16 %v79, %v77
  %v96 = vpack.c.b16 %v82, %v80
  %v97 = vpack.c.b16 %v83, %v81
  %vm110 = vcmask 883712
  %v112 = vsel %vm110, %v40, 0
  %v115 = vsel %vm110, %v41, 0
  %vm117 = vcmask 1045504
  %v119 = vsel %vm117, %v96, 0
  %v122 = vsel %vm117, %v97, 0
  %124 = vmatprep.subr.bf16.mxu0 %v85
  %125 = vmatpush1.bf16.msra.mxu0 %v84
  %126 = vmatprep.subr.bf16.mxu0 %v87
  %127 = vmatpush1.bf16.msra.mxu0 %v86
  %128 = vmatprep.subr.bf16.mxu0 %v89
  %129 = vmatpush1.bf16.msra.mxu0 %v88
  %130 = vmatprep.subr.bf16.mxu0 %v91
  %131 = vmatpush1.bf16.msra.mxu0 %v90
  %132 = vmatprep.subr.bf16.mxu0 %v93
  %133 = vmatpush1.bf16.msra.mxu0 %v92
  %134 = vmatprep.subr.bf16.mxu0 %v95
  %135 = vmatpush1.bf16.msra.mxu0 %v94
  %136 = vmatprep.subr.bf16.mxu0 %v122
  %137 = vmatpush1.bf16.msra.mxu0 %v119
  %138 = vmatprep.subr.bf16.mxu0 0
  %139 = vmatpush1.bf16.msra.mxu0 0
  %140 = vmatprep.subr.bf16.mxu0 0
  %141 = vmatpush1.bf16.msra.mxu0 0
  %142 = vmatprep.subr.bf16.mxu0 0
  %143 = vmatpush1.bf16.msra.mxu0 0
  %144 = vmatprep.subr.bf16.mxu0 0
  %145 = vmatpush1.bf16.msra.mxu0 0
  %146 = vmatprep.subr.bf16.mxu0 0
  %147 = vmatpush1.bf16.msra.mxu0 0
  %148 = vmatprep.subr.bf16.mxu0 0
  %149 = vmatpush1.bf16.msra.mxu0 0
  %150 = vmatprep.subr.bf16.mxu0 0
  %151 = vmatpush1.bf16.msra.mxu0 0
  %152 = vmatprep.subr.bf16.mxu0 0
  %153 = vmatpush1.bf16.msra.mxu0 0
  %154 = vmatprep.subr.bf16.mxu0 0
  %155 = vmatpush1.bf16.msra.mxu0 0
  %156 = vmatprep.mubr.bf16.mxu0 0
  %157 = vmatmul.mubr.bf16.gmra.mrb[0].mxu0 %v112
  %v158 = vpop.f32.mrb[0].mxu0
  %v159 = vadd.f32 0.0, %v158
  %v160 = vpop.f32.mrb[0].mxu0
  %v161 = vadd.f32 0.0, %v160
  %v162 = vpop.f32.mrb[0].mxu0
  %v163 = vadd.f32 0.0, %v162
  %v164 = vpop.f32.mrb[0].mxu0
  %v165 = vadd.f32 0.0, %v164
  %166 = vmatprep.mubr.bf16.mxu0 0
  %167 = vmatmul.mubr.bf16.gmra.mrb[0].mxu0 %v115
  %v168 = vpop.f32.mrb[0].mxu0
  %v169 = vadd.f32 0.0, %v168
  %v170 = vpop.f32.mrb[0].mxu0
  %v171 = vadd.f32 0.0, %v170
  %v172 = vpop.f32.mrb[0].mxu0
  %v173 = vadd.f32 0.0, %v172
  %v174 = vpop.f32.mrb[0].mxu0
  %v175 = vadd.f32 0.0, %v174
  %176 = vdwg.mxu0
  %v177 = vpack.c.bf16 %v163, %v159
  %v178 = vpack.c.bf16 %v165, %v161
  %v179 = vpack.c.bf16 %v173, %v169
  %v180 = vpack.c.bf16 %v175, %v171
  %v185 = vunpack.c.l.b16 %v177
  %v186 = vunpack.c.l.b16 %v178
  %v187 = vunpack.c.h.b16 %v177
  %v188 = vunpack.c.h.b16 %v178
  %v189 = vunpack.c.l.b16 %v179
  %v190 = vunpack.c.l.b16 %v180
  %v191 = vunpack.c.h.b16 %v179
  %v192 = vunpack.c.h.b16 %v180
  %v193 = vpack.c.b16 %v186, %v185
  %v194 = vpack.c.b16 %v188, %v187
  %v195 = vpack.c.b16 %v190, %v189
  %v196 = vpack.c.b16 %v192, %v191
  %201 = vst [vmem:[%s2] sm:$0xff] %v193
  %202 = vst [vmem:[%s2 + $0x8] sm:$0xff] %v194
  %203 = vst [vmem:[%s2 + $0x10] sm:$0xff] %v195
  %204 = vst [vmem:[%s2 + $0x18] sm:$0xff] %v196
  %v205 = vadd.f32 %v159, %v163
  %v206 = vadd.f32 %v205, %v169
  %v207 = vadd.f32 %v206, %v173
  %v208 = vrot.slane %v207, 4
  %v209 = vadd.f32 %v207, %v208
  %v210 = vrot.slane %v209, 2
  %v211 = vadd.f32 %v209, %v210
  %v212 = vrot.slane %v211, 1
  %v213 = vadd.f32 %v211, %v212
  %v214 = vadd.f32 %v161, %v165
  %v215 = vadd.f32 %v214, %v171
  %v216 = vadd.f32 %v215, %v175
  %v217 = vrot.slane %v216, 4
  %v218 = vadd.f32 %v216, %v217
  %v219 = vrot.slane %v218, 2
  %v220 = vadd.f32 %v218, %v219
  %v221 = vrot.slane %v220, 1
  %v222 = vadd.f32 %v220, %v221
  %v223 = vmul.f32 %v159, %v159
  %v224 = vmul.f32 %v161, %v161
  %v225 = vmul.f32 %v163, %v163
  %v226 = vmul.f32 %v165, %v165
  %v227 = vmul.f32 %v169, %v169
  %v228 = vmul.f32 %v171, %v171
  %v229 = vmul.f32 %v173, %v173
  %v230 = vmul.f32 %v175, %v175
  %v231 = vadd.f32 %v223, %v225
  %v232 = vadd.f32 %v231, %v227
  %v233 = vadd.f32 %v232, %v229
  %v234 = vrot.slane %v233, 4
  %v235 = vadd.f32 %v233, %v234
  %v236 = vrot.slane %v235, 2
  %v237 = vadd.f32 %v235, %v236
  %v238 = vrot.slane %v237, 1
  %v239 = vadd.f32 %v237, %v238
  %v240 = vadd.f32 %v224, %v226
  %v241 = vadd.f32 %v240, %v228
  %v242 = vadd.f32 %v241, %v230
  %v243 = vrot.slane %v242, 4
  %v244 = vadd.f32 %v242, %v243
  %v245 = vrot.slane %v244, 2
  %v246 = vadd.f32 %v244, %v245
  %v247 = vrot.slane %v246, 1
  %v248 = vadd.f32 %v246, %v247
  %v249 = vlaneseq
  %v250 = vshrl.u32 %v249, 7
  %vm251 = vcmp.eq.s32.totalorder %v250, 0
  %v252 = vsel %vm251, %v213, 0.0
  %v253 = vsel %vm251, %v222, 0.0
  %vm254 = vcmp.eq.s32.totalorder %v250, 1
  %v255 = vsel %vm254, %v239, 0.0
  %v256 = vsel %vm254, %v248, 0.0
  %v257 = vadd.f32 %v252, %v255
  %v258 = vadd.f32 %v253, %v256
  %259 = vst [vmem:[%s3] sm:$0xff] %v257
  %260 = vst [vmem:[%s3 + $0x8] sm:$0xff] %v258
  // Predicated region
  $region10: #{encoder_forward.4} parent=0 // pred_check
    _
  $region11: #{encoder_forward.4} parent=0 // pred_check_branch
    %262 = sbr.rel (0) target = $region13
  $region12: #{encoder_forward.4} parent=0 // pred_region
    _
  $region13: #{encoder_forward.4} parent=0 // pred_fallthru
    _
  // Predicated region
  $region14: #{encoder_forward.4} parent=0 // pred_check
    _
  $region15: #{encoder_forward.4} parent=0 // pred_check_branch
    %264 = sbr.rel (0) target = $region17
  $region16: #{encoder_forward.4} parent=0 // pred_region
    _
  $region17: #{encoder_forward.4} parent=0 // pred_fallthru
    _
  // Predicated region
  $region18: #{encoder_forward.4} parent=0 // pred_check
    _
  $region19: #{encoder_forward.4} parent=0 // pred_check_branch
    %266 = sbr.rel (0) target = $region21
  $region20: #{encoder_forward.4} parent=0 // pred_region
    _
  $region21: #{encoder_forward.4} parent=0 // pred_fallthru
    _
  // Predicated region
  $region22: #{encoder_forward.4} parent=0 // pred_check
    _
  $region23: #{encoder_forward.4} parent=0 // pred_check_branch
    %268 = sbr.rel (0) target = $region25
  $region24: #{encoder_forward.4} parent=0 // pred_region
    _
  $region25: #{encoder_forward.4} parent=0 // pred_fallthru
    _

// kernel: tile.35
$region0: #{tile.35}
  #allocation0 [shape = 's32[1]{0}', space=sflag, size = 0x4, scoped, tag = 'scoped memory for tile.35']
  %s0 = inlined_call_operand.vmem [shape: f32[64], index: 0, kind: input, shape index: {}]
  %s1 = inlined_call_operand.vmem [shape: f32[4,64], index: 1, kind: output, shape index: {}]
  // Predicated region
  $region2: #{tile.35} parent=0 // pred_check
    _
  $region3: #{tile.35} parent=0 // pred_check_branch
    %3 = sbr.rel (0) target = $region5
  $region4: #{tile.35} parent=0 // pred_region
    _
  $region5: #{tile.35} parent=0 // pred_fallthru
    _
  %v4 = vld [vmem:[%s0] ss:$0 sm:$0xff]
  %5 = vst [vmem:[%s1] sm:$0xf] %v4

// kernel: tile.36
$region0: #{tile.36}
  %s0 = inlined_call_operand.vmem [shape: f32[4,64], index: 0, kind: input, shape index: {}]
  %s1 = inlined_call_operand.vmem [shape: f32[1,256], index: 1, kind: output, shape index: {}]
  $region1: #{tile.36} parent=0
    #allocation0 [shape = 'u8[8192]{0}', space=vmem, size = 0x2000, scoped, tag = 'scoped mem for output reshape']
    #allocation1 [shape = 'u8[4096]{0}', space=vmem, size = 0x1000, scoped, tag = 'scoped mem for input reshape']
    %s3 = sshllo.u32 0, 4
    %v4 = vld [vmem:[%s0] sm:%s3]
    %5 = vst [vmem:[#allocation1] sm:%s3] %v4
    %s6 = smov 3
    %v7 = vld [vmem:[#allocation1] ss:$2 sm:%s6]
    %vm8 = vcmask 523264
    %9 = vst.msk [vmem:[#allocation0] ss:$8 sm:$0x3] %vm8, %v7
    %s10 = scalar_lea.vmem [#allocation1], 1
    %s11 = smov 3
    %v12 = vld [vmem:[%s10] ss:$2 sm:%s11]
    %13 = vrot.lane.b32.xlu0 %v12, 64
    %v14 = vpop.permute.xlu0 %13
    %vm15 = vcmask 1048064
    %16 = vst.msk [vmem:[#allocation0] ss:$8 sm:$0x3] %vm15, %v14
    %s18 = sshllo.u32 0, 1
    %v20 = vld [vmem:[#allocation0] sm:%s18]
    %s21 = sshllo.u32 0, 1
    %22 = vst [vmem:[%s1] sm:%s21] %v20
    %s23 = scalar_lea.vmem [#allocation0], 8
    %v24 = vld [vmem:[%s23] sm:%s18]
    %s25 = sshllo.u32 0, 1
    %s26 = scalar_lea.vmem %s1, 1
    %27 = vst [vmem:[%s26] sm:%s25] %v24

// kernel: encoder_forward.7
$region0: #{encoder_forward.7}
  #allocation0 [shape = 'u32[]', space=smem, size = 0x4, offset = 0x4, fixed_abs, tag = 'smem constant byte address 0x4 - core index']
  #allocation1 [shape = 'u32[144,128]{1,0:T(1,128)}', space=vmem, size = 0x12000, scoped, tag = 'internal scratch']
  %s0 = inlined_call_operand.vmem [shape: bf16[8,128], index: 0, kind: input, shape index: {}]
  %s1 = inlined_call_operand.vmem [shape: f32[1,128], index: 1, kind: input, shape index: {}]
  %s2 = inlined_call_operand.vmem [shape: f32[1,128], index: 2, kind: input, shape index: {}]
  %s3 = inlined_call_operand.vmem [shape: f32[8,128], index: 3, kind: output, shape index: {}]
  %s4 = sld [smem:[#allocation0]]
  $region22: #{encoder_forward.7} parent=0
    _
  %s6 = ssub.s32 1, %s4
  %s7 = scalar_select 0, %s6, %s4
  // Predicated region
  $region2: #{encoder_forward.7} parent=0 // pred_check
    _
  $region3: #{encoder_forward.7} parent=0 // pred_check_branch
    %9 = sbr.rel (0) target = $region5
  $region4: #{encoder_forward.7} parent=0 // pred_region
    _
  $region5: #{encoder_forward.7} parent=0 // pred_fallthru
    _
  // Predicated region
  $region6: #{encoder_forward.7} parent=0 // pred_check
    _
  $region7: #{encoder_forward.7} parent=0 // pred_check_branch
    %11 = sbr.rel (0) target = $region9
  $region8: #{encoder_forward.7} parent=0 // pred_region
    _
  $region9: #{encoder_forward.7} parent=0 // pred_fallthru
    _
  // Predicated region
  $region10: #{encoder_forward.7} parent=0 // pred_check
    _
  $region11: #{encoder_forward.7} parent=0 // pred_check_branch
    %13 = sbr.rel (0) target = $region13
  $region12: #{encoder_forward.7} parent=0 // pred_region
    _
  $region13: #{encoder_forward.7} parent=0 // pred_fallthru
    _
  %v14 = vld [vmem:[%s0] sm:$0xf]
  %v15 = vunpack.c.l.bf16 %v14
  %v16 = vld [vmem:[%s1] sm:$0x1]
  %v18 = vlaneseq
  %v19 = vshrl.u32 %v18, 7
  %v20 = vsub.s32 0, %v19
  %v21 = vrot.slane %v16, %v20
  %v23 = vmul.f32 %v15, %v21
  %v24 = vld [vmem:[%s2] sm:$0x1]
  %v26 = vlaneseq
  %v27 = vshrl.u32 %v26, 7
  %v28 = vsub.s32 0, %v27
  %v29 = vrot.slane %v24, %v28
  %v31 = vadd.f32 %v23, %v29
  %v32 = vmax.f32 %v31, 0.0
  %33 = vst [vmem:[%s3] sm:$0xff] %v32
  // Predicated region
  $region14: #{encoder_forward.7} parent=0 // pred_check
    _
  $region15: #{encoder_forward.7} parent=0 // pred_check_branch
    %35 = sbr.rel (0) target = $region17
  $region16: #{encoder_forward.7} parent=0 // pred_region
    _
  $region17: #{encoder_forward.7} parent=0 // pred_fallthru
    _
  // Predicated region
  $region18: #{encoder_forward.7} parent=0 // pred_check
    _
  $region19: #{encoder_forward.7} parent=0 // pred_check_branch
    %37 = sbr.rel (0) target = $region21
  $region20: #{encoder_forward.7} parent=0 // pred_region
    _
  $region21: #{encoder_forward.7} parent=0 // pred_fallthru
    _

// kernel: encoder_forward.5
$region0: #{encoder_forward.5}
  #allocation0 [shape = 'u32[]', space=smem, size = 0x4, offset = 0x4, fixed_abs, tag = 'smem constant byte address 0x4 - core index']
  #allocation1 [shape = 'u32[144,128]{1,0:T(1,128)}', space=vmem, size = 0x12000, scoped, tag = 'internal scratch']
  %s0 = inlined_call_operand.vmem [shape: bf16[16,512], index: 0, kind: input, shape index: {}]
  %s1 = inlined_call_operand.vmem [shape: f32[1,512], index: 1, kind: input, shape index: {}]
  %s2 = inlined_call_operand.vmem [shape: f32[1,512], index: 2, kind: input, shape index: {}]
  %s3 = inlined_call_operand.vmem [shape: bf16[512,128], index: 3, kind: input, shape index: {}]
  %s4 = inlined_call_operand.vmem [shape: bf16[16,128], index: 4, kind: output, shape index: {0}]
  %s5 = inlined_call_operand.vmem [shape: f32[8,128], index: 5, kind: output, shape index: {1}]
  %6 = xla_tuple %s4, %s5
  %s7 = sld [smem:[#allocation0]]
  $region34: #{encoder_forward.5} parent=0
    _
  %s9 = ssub.s32 1, %s7
  %s10 = scalar_select 0, %s9, %s7
  // Predicated region
  $region2: #{encoder_forward.5} parent=0 // pred_check
    _
  $region3: #{encoder_forward.5} parent=0 // pred_check_branch
    %12 = sbr.rel (0) target = $region5
  $region4: #{encoder_forward.5} parent=0 // pred_region
    _
  $region5: #{encoder_forward.5} parent=0 // pred_fallthru
    _
  // Predicated region
  $region6: #{encoder_forward.5} parent=0 // pred_check
    _
  $region7: #{encoder_forward.5} parent=0 // pred_check_branch
    %14 = sbr.rel (0) target = $region9
  $region8: #{encoder_forward.5} parent=0 // pred_region
    _
  $region9: #{encoder_forward.5} parent=0 // pred_fallthru
    _
  // Predicated region
  $region10: #{encoder_forward.5} parent=0 // pred_check
    _
  $region11: #{encoder_forward.5} parent=0 // pred_check_branch
    %16 = sbr.rel (0) target = $region13
  $region12: #{encoder_forward.5} parent=0 // pred_region
    _
  $region13: #{encoder_forward.5} parent=0 // pred_fallthru
    _
  // Predicated region
  $region14: #{encoder_forward.5} parent=0 // pred_check
    _
  $region15: #{encoder_forward.5} parent=0 // pred_check_branch
    %18 = sbr.rel (0) target = $region17
  $region16: #{encoder_forward.5} parent=0 // pred_region
    _
  $region17: #{encoder_forward.5} parent=0 // pred_fallthru
    _
  %v20 = vld [vmem:[%s0] sm:$0xff]
  %v21 = vld [vmem:[%s0 + $0x8] sm:$0xff]
  %v22 = vld [vmem:[%s0 + $0x10] sm:$0xff]
  %v23 = vld [vmem:[%s0 + $0x18] sm:$0xff]
  %v24 = vunpack.c.l.bf16 %v20
  %v25 = vunpack.c.h.bf16 %v20
  %v26 = vunpack.c.l.bf16 %v21
  %v27 = vunpack.c.h.bf16 %v21
  %v28 = vunpack.c.l.bf16 %v22
  %v29 = vunpack.c.h.bf16 %v22
  %v30 = vunpack.c.l.bf16 %v23
  %v31 = vunpack.c.h.bf16 %v23
  %v32 = vld [vmem:[%s1] sm:$0xf]
  %v34 = vlaneseq
  %v35 = vshrl.u32 %v34, 7
  %v36 = vsub.s32 0, %v35
  %v37 = vrot.slane %v32, %v36
  %v38 = vlaneseq
  %v39 = vshrl.u32 %v38, 7
  %v40 = vsub.s32 1, %v39
  %v41 = vrot.slane %v32, %v40
  %v42 = vlaneseq
  %v43 = vshrl.u32 %v42, 7
  %v44 = vsub.s32 2, %v43
  %v45 = vrot.slane %v32, %v44
  %v46 = vlaneseq
  %v47 = vshrl.u32 %v46, 7
  %v48 = vsub.s32 3, %v47
  %v49 = vrot.slane %v32, %v48
  %v54 = vmul.f32 %v24, %v37
  %v55 = vmul.f32 %v25, %v41
  %v56 = vmul.f32 %v26, %v45
  %v57 = vmul.f32 %v27, %v49
  %v58 = vmul.f32 %v28, %v37
  %v59 = vmul.f32 %v29, %v41
  %v60 = vmul.f32 %v30, %v45
  %v61 = vmul.f32 %v31, %v49
  %v62 = vld [vmem:[%s2] sm:$0xf]
  %v64 = vlaneseq
  %v65 = vshrl.u32 %v64, 7
  %v66 = vsub.s32 0, %v65
  %v67 = vrot.slane %v62, %v66
  %v68 = vlaneseq
  %v69 = vshrl.u32 %v68, 7
  %v70 = vsub.s32 1, %v69
  %v71 = vrot.slane %v62, %v70
  %v72 = vlaneseq
  %v73 = vshrl.u32 %v72, 7
  %v74 = vsub.s32 2, %v73
  %v75 = vrot.slane %v62, %v74
  %v76 = vlaneseq
  %v77 = vshrl.u32 %v76, 7
  %v78 = vsub.s32 3, %v77
  %v79 = vrot.slane %v62, %v78
  %v84 = vadd.f32 %v54, %v67
  %v85 = vadd.f32 %v55, %v71
  %v86 = vadd.f32 %v56, %v75
  %v87 = vadd.f32 %v57, %v79
  %v88 = vadd.f32 %v58, %v67
  %v89 = vadd.f32 %v59, %v71
  %v90 = vadd.f32 %v60, %v75
  %v91 = vadd.f32 %v61, %v79
  %v92 = vmax.f32 %v84, 0.0
  %v93 = vmax.f32 %v85, 0.0
  %v94 = vmax.f32 %v86, 0.0
  %v95 = vmax.f32 %v87, 0.0
  %v96 = vmax.f32 %v88, 0.0
  %v97 = vmax.f32 %v89, 0.0
  %v98 = vmax.f32 %v90, 0.0
  %v99 = vmax.f32 %v91, 0.0
  %v100 = vpack.c.bf16 %v96, %v92
  %v101 = vpack.c.bf16 %v97, %v93
  %v102 = vpack.c.bf16 %v98, %v94
  %v103 = vpack.c.bf16 %v99, %v95
  %v104 = vld [vmem:[%s3] sm:$0xf]
  %v105 = vld [vmem:[%s3 + $0x4] sm:$0xf]
  %v106 = vld [vmem:[%s3 + $0x8] sm:$0xf]
  %v107 = vld [vmem:[%s3 + $0xc] sm:$0xf]
  %v108 = vld [vmem:[%s3 + $0x10] sm:$0xf]
  %v109 = vld [vmem:[%s3 + $0x14] sm:$0xf]
  %v110 = vld [vmem:[%s3 + $0x18] sm:$0xf]
  %v111 = vld [vmem:[%s3 + $0x1c] sm:$0xf]
  %v112 = vld [vmem:[%s3 + $0x20] sm:$0xf]
  %v113 = vld [vmem:[%s3 + $0x24] sm:$0xf]
  %v114 = vld [vmem:[%s3 + $0x28] sm:$0xf]
  %v115 = vld [vmem:[%s3 + $0x2c] sm:$0xf]
  %v116 = vld [vmem:[%s3 + $0x30] sm:$0xf]
  %v117 = vld [vmem:[%s3 + $0x34] sm:$0xf]
  %v118 = vld [vmem:[%s3 + $0x38] sm:$0xf]
  %v119 = vld [vmem:[%s3 + $0x3c] sm:$0xf]
  %v120 = vld [vmem:[%s3 + $0x40] sm:$0xf]
  %v121 = vld [vmem:[%s3 + $0x44] sm:$0xf]
  %v122 = vld [vmem:[%s3 + $0x48] sm:$0xf]
  %v123 = vld [vmem:[%s3 + $0x4c] sm:$0xf]
  %v124 = vld [vmem:[%s3 + $0x50] sm:$0xf]
  %v125 = vld [vmem:[%s3 + $0x54] sm:$0xf]
  %v126 = vld [vmem:[%s3 + $0x58] sm:$0xf]
  %v127 = vld [vmem:[%s3 + $0x5c] sm:$0xf]
  %v128 = vld [vmem:[%s3 + $0x60] sm:$0xf]
  %v129 = vld [vmem:[%s3 + $0x64] sm:$0xf]
  %v130 = vld [vmem:[%s3 + $0x68] sm:$0xf]
  %v131 = vld [vmem:[%s3 + $0x6c] sm:$0xf]
  %v132 = vld [vmem:[%s3 + $0x70] sm:$0xf]
  %v133 = vld [vmem:[%s3 + $0x74] sm:$0xf]
  %v134 = vld [vmem:[%s3 + $0x78] sm:$0xf]
  %v135 = vld [vmem:[%s3 + $0x7c] sm:$0xf]
  %v136 = vld [vmem:[%s3 + $0x80] sm:$0xf]
  %v137 = vld [vmem:[%s3 + $0x84] sm:$0xf]
  %v138 = vld [vmem:[%s3 + $0x88] sm:$0xf]
  %v139 = vld [vmem:[%s3 + $0x8c] sm:$0xf]
  %v140 = vld [vmem:[%s3 + $0x90] sm:$0xf]
  %v141 = vld [vmem:[%s3 + $0x94] sm:$0xf]
  %v142 = vld [vmem:[%s3 + $0x98] sm:$0xf]
  %v143 = vld [vmem:[%s3 + $0x9c] sm:$0xf]
  %v144 = vld [vmem:[%s3 + $0xa0] sm:$0xf]
  %v145 = vld [vmem:[%s3 + $0xa4] sm:$0xf]
  %v146 = vld [vmem:[%s3 + $0xa8] sm:$0xf]
  %v147 = vld [vmem:[%s3 + $0xac] sm:$0xf]
  %v148 = vld [vmem:[%s3 + $0xb0] sm:$0xf]
  %v149 = vld [vmem:[%s3 + $0xb4] sm:$0xf]
  %v150 = vld [vmem:[%s3 + $0xb8] sm:$0xf]
  %v151 = vld [vmem:[%s3 + $0xbc] sm:$0xf]
  %v152 = vld [vmem:[%s3 + $0xc0] sm:$0xf]
  %v153 = vld [vmem:[%s3 + $0xc4] sm:$0xf]
  %v154 = vld [vmem:[%s3 + $0xc8] sm:$0xf]
  %v155 = vld [vmem:[%s3 + $0xcc] sm:$0xf]
  %v156 = vld [vmem:[%s3 + $0xd0] sm:$0xf]
  %v157 = vld [vmem:[%s3 + $0xd4] sm:$0xf]
  %v158 = vld [vmem:[%s3 + $0xd8] sm:$0xf]
  %v159 = vld [vmem:[%s3 + $0xdc] sm:$0xf]
  %v160 = vld [vmem:[%s3 + $0xe0] sm:$0xf]
  %v161 = vld [vmem:[%s3 + $0xe4] sm:$0xf]
  %v162 = vld [vmem:[%s3 + $0xe8] sm:$0xf]
  %v163 = vld [vmem:[%s3 + $0xec] sm:$0xf]
  %v164 = vld [vmem:[%s3 + $0xf0] sm:$0xf]
  %v165 = vld [vmem:[%s3 + $0xf4] sm:$0xf]
  %v166 = vld [vmem:[%s3 + $0xf8] sm:$0xf]
  %v167 = vld [vmem:[%s3 + $0xfc] sm:$0xf]
  %v232 = vunpack.c.l.b16 %v104
  %v233 = vunpack.c.l.b16 %v105
  %v234 = vunpack.c.l.b16 %v106
  %v235 = vunpack.c.l.b16 %v107
  %v236 = vunpack.c.l.b16 %v108
  %v237 = vunpack.c.l.b16 %v109
  %v238 = vunpack.c.l.b16 %v110
  %v239 = vunpack.c.l.b16 %v111
  %v240 = vunpack.c.l.b16 %v112
  %v241 = vunpack.c.l.b16 %v113
  %v242 = vunpack.c.l.b16 %v114
  %v243 = vunpack.c.l.b16 %v115
  %v244 = vunpack.c.l.b16 %v116
  %v245 = vunpack.c.l.b16 %v117
  %v246 = vunpack.c.l.b16 %v118
  %v247 = vunpack.c.l.b16 %v119
  %v248 = vunpack.c.l.b16 %v120
  %v249 = vunpack.c.l.b16 %v121
  %v250 = vunpack.c.l.b16 %v122
  %v251 = vunpack.c.l.b16 %v123
  %v252 = vunpack.c.l.b16 %v124
  %v253 = vunpack.c.l.b16 %v125
  %v254 = vunpack.c.l.b16 %v126
  %v255 = vunpack.c.l.b16 %v127
  %v256 = vunpack.c.l.b16 %v128
  %v257 = vunpack.c.l.b16 %v129
  %v258 = vunpack.c.l.b16 %v130
  %v259 = vunpack.c.l.b16 %v131
  %v260 = vunpack.c.l.b16 %v132
  %v261 = vunpack.c.l.b16 %v133
  %v262 = vunpack.c.l.b16 %v134
  %v263 = vunpack.c.l.b16 %v135
  %v264 = vunpack.c.l.b16 %v136
  %v265 = vunpack.c.l.b16 %v137
  %v266 = vunpack.c.l.b16 %v138
  %v267 = vunpack.c.l.b16 %v139
  %v268 = vunpack.c.l.b16 %v140
  %v269 = vunpack.c.l.b16 %v141
  %v270 = vunpack.c.l.b16 %v142
  %v271 = vunpack.c.l.b16 %v143
  %v272 = vunpack.c.l.b16 %v144
  %v273 = vunpack.c.l.b16 %v145
  %v274 = vunpack.c.l.b16 %v146
  %v275 = vunpack.c.l.b16 %v147
  %v276 = vunpack.c.l.b16 %v148
  %v277 = vunpack.c.l.b16 %v149
  %v278 = vunpack.c.l.b16 %v150
  %v279 = vunpack.c.l.b16 %v151
  %v280 = vunpack.c.l.b16 %v152
  %v281 = vunpack.c.l.b16 %v153
  %v282 = vunpack.c.l.b16 %v154
  %v283 = vunpack.c.l.b16 %v155
  %v284 = vunpack.c.l.b16 %v156
  %v285 = vunpack.c.l.b16 %v157
  %v286 = vunpack.c.l.b16 %v158
  %v287 = vunpack.c.l.b16 %v159
  %v288 = vunpack.c.l.b16 %v160
  %v289 = vunpack.c.l.b16 %v161
  %v290 = vunpack.c.l.b16 %v162
  %v291 = vunpack.c.l.b16 %v163
  %v292 = vunpack.c.l.b16 %v164
  %v293 = vunpack.c.l.b16 %v165
  %v294 = vunpack.c.l.b16 %v166
  %v295 = vunpack.c.l.b16 %v167
  %v296 = vpack.c.b16 %v233, %v232
  %v297 = vpack.c.b16 %v235, %v234
  %v298 = vpack.c.b16 %v237, %v236
  %v299 = vpack.c.b16 %v239, %v238
  %v300 = vpack.c.b16 %v241, %v240
  %v301 = vpack.c.b16 %v243, %v242
  %v302 = vpack.c.b16 %v245, %v244
  %v303 = vpack.c.b16 %v247, %v246
  %v304 = vpack.c.b16 %v249, %v248
  %v305 = vpack.c.b16 %v251, %v250
  %v306 = vpack.c.b16 %v253, %v252
  %v307 = vpack.c.b16 %v255, %v254
  %v308 = vpack.c.b16 %v257, %v256
  %v309 = vpack.c.b16 %v259, %v258
  %v310 = vpack.c.b16 %v261, %v260
  %v311 = vpack.c.b16 %v263, %v262
  %v312 = vpack.c.b16 %v265, %v264
  %v313 = vpack.c.b16 %v267, %v266
  %v314 = vpack.c.b16 %v269, %v268
  %v315 = vpack.c.b16 %v271, %v270
  %v316 = vpack.c.b16 %v273, %v272
  %v317 = vpack.c.b16 %v275, %v274
  %v318 = vpack.c.b16 %v277, %v276
  %v319 = vpack.c.b16 %v279, %v278
  %v320 = vpack.c.b16 %v281, %v280
  %v321 = vpack.c.b16 %v283, %v282
  %v322 = vpack.c.b16 %v285, %v284
  %v323 = vpack.c.b16 %v287, %v286
  %v324 = vpack.c.b16 %v289, %v288
  %v325 = vpack.c.b16 %v291, %v290
  %v326 = vpack.c.b16 %v293, %v292
  %v327 = vpack.c.b16 %v295, %v294
  %360 = vmatprep.subr.bf16.mxu0 0
  %361 = vmatpush1.bf16.msra.mxu0 %v296
  %362 = vmatprep.subr.bf16.mxu0 0
  %363 = vmatpush1.bf16.msra.mxu0 %v297
  %364 = vmatprep.subr.bf16.mxu0 0
  %365 = vmatpush1.bf16.msra.mxu0 %v298
  %366 = vmatprep.subr.bf16.mxu0 0
  %367 = vmatpush1.bf16.msra.mxu0 %v299
  %368 = vmatprep.subr.bf16.mxu0 0
  %369 = vmatpush1.bf16.msra.mxu0 %v300
  %370 = vmatprep.subr.bf16.mxu0 0
  %371 = vmatpush1.bf16.msra.mxu0 %v301
  %372 = vmatprep.subr.bf16.mxu0 0
  %373 = vmatpush1.bf16.msra.mxu0 %v302
  %374 = vmatprep.subr.bf16.mxu0 0
  %375 = vmatpush1.bf16.msra.mxu0 %v303
  %376 = vmatprep.subr.bf16.mxu0 0
  %377 = vmatpush1.bf16.msra.mxu0 %v304
  %378 = vmatprep.subr.bf16.mxu0 0
  %379 = vmatpush1.bf16.msra.mxu0 %v305
  %380 = vmatprep.subr.bf16.mxu0 0
  %381 = vmatpush1.bf16.msra.mxu0 %v306
  %382 = vmatprep.subr.bf16.mxu0 0
  %383 = vmatpush1.bf16.msra.mxu0 %v307
  %384 = vmatprep.subr.bf16.mxu0 0
  %385 = vmatpush1.bf16.msra.mxu0 %v308
  %386 = vmatprep.subr.bf16.mxu0 0
  %387 = vmatpush1.bf16.msra.mxu0 %v309
  %388 = vmatprep.subr.bf16.mxu0 0
  %389 = vmatpush1.bf16.msra.mxu0 %v310
  %390 = vmatprep.subr.bf16.mxu0 0
  %391 = vmatpush1.bf16.msra.mxu0 %v311
  %392 = vmatprep.mubr.bf16.mxu0 %v101
  %393 = vmatmul.mubr.bf16.gmra.mrb[0].mxu0 %v100
  %v394 = vpop.f32.mrb[0].mxu0
  %v395 = vadd.f32 0.0, %v394
  %v396 = vpop.f32.mrb[0].mxu0
  %v397 = vpop.f32.mrb[0].mxu0
  %v398 = vadd.f32 0.0, %v397
  %v399 = vpop.f32.mrb[0].mxu0
  %400 = vdwg.mxu0
  %401 = vmatprep.subr.bf16.mxu0 0
  %402 = vmatpush1.bf16.msra.mxu0 %v312
  %403 = vmatprep.subr.bf16.mxu0 0
  %404 = vmatpush1.bf16.msra.mxu0 %v313
  %405 = vmatprep.subr.bf16.mxu0 0
  %406 = vmatpush1.bf16.msra.mxu0 %v314
  %407 = vmatprep.subr.bf16.mxu0 0
  %408 = vmatpush1.bf16.msra.mxu0 %v315
  %409 = vmatprep.subr.bf16.mxu0 0
  %410 = vmatpush1.bf16.msra.mxu0 %v316
  %411 = vmatprep.subr.bf16.mxu0 0
  %412 = vmatpush1.bf16.msra.mxu0 %v317
  %413 = vmatprep.subr.bf16.mxu0 0
  %414 = vmatpush1.bf16.msra.mxu0 %v318
  %415 = vmatprep.subr.bf16.mxu0 0
  %416 = vmatpush1.bf16.msra.mxu0 %v319
  %417 = vmatprep.subr.bf16.mxu0 0
  %418 = vmatpush1.bf16.msra.mxu0 %v320
  %419 = vmatprep.subr.bf16.mxu0 0
  %420 = vmatpush1.bf16.msra.mxu0 %v321
  %421 = vmatprep.subr.bf16.mxu0 0
  %422 = vmatpush1.bf16.msra.mxu0 %v322
  %423 = vmatprep.subr.bf16.mxu0 0
  %424 = vmatpush1.bf16.msra.mxu0 %v323
  %425 = vmatprep.subr.bf16.mxu0 0
  %426 = vmatpush1.bf16.msra.mxu0 %v324
  %427 = vmatprep.subr.bf16.mxu0 0
  %428 = vmatpush1.bf16.msra.mxu0 %v325
  %429 = vmatprep.subr.bf16.mxu0 0
  %430 = vmatpush1.bf16.msra.mxu0 %v326
  %431 = vmatprep.subr.bf16.mxu0 0
  %432 = vmatpush1.bf16.msra.mxu0 %v327
  %433 = vmatprep.mubr.bf16.mxu0 %v103
  %434 = vmatmul.mubr.bf16.gmra.mrb[0].mxu0 %v102
  %v435 = vpop.f32.mrb[0].mxu0
  %v436 = vadd.f32 %v395, %v435
  %v437 = vpop.f32.mrb[0].mxu0
  %v438 = vpop.f32.mrb[0].mxu0
  %v439 = vadd.f32 %v398, %v438
  %v440 = vpop.f32.mrb[0].mxu0
  %441 = vdwg.mxu0
  %v442 = vpack.c.bf16 %v439, %v436
  %v444 = vunpack.c.l.b16 %v442
  %v445 = vunpack.c.h.b16 %v442
  %v446 = vpack.c.b16 %v444, %v444
  %v447 = vpack.c.b16 %v445, %v445
  %450 = vst [vmem:[%s4] sm:$0xf] %v446
  %451 = vst [vmem:[%s4 + $0x4] sm:$0xf] %v447
  %v452 = vadd.f32 %v436, %v439
  %v453 = vrot.slane %v452, 4
  %v454 = vadd.f32 %v452, %v453
  %v455 = vrot.slane %v454, 2
  %v456 = vadd.f32 %v454, %v455
  %v457 = vrot.slane %v456, 1
  %v458 = vadd.f32 %v456, %v457
  %v459 = vmul.f32 %v436, %v436
  %v460 = vmul.f32 %v439, %v439
  %v461 = vadd.f32 %v459, %v460
  %v462 = vrot.slane %v461, 4
  %v463 = vadd.f32 %v461, %v462
  %v464 = vrot.slane %v463, 2
  %v465 = vadd.f32 %v463, %v464
  %v466 = vrot.slane %v465, 1
  %v467 = vadd.f32 %v465, %v466
  %v468 = vlaneseq
  %v469 = vshrl.u32 %v468, 7
  %vm470 = vcmp.eq.s32.totalorder %v469, 0
  %v471 = vsel %vm470, %v458, 0.0
  %vm472 = vcmp.eq.s32.totalorder %v469, 1
  %v473 = vsel %vm472, %v467, 0.0
  %v474 = vadd.f32 %v471, %v473
  %475 = vst [vmem:[%s5] sm:$0xff] %v474
  // Predicated region
  $region18: #{encoder_forward.5} parent=0 // pred_check
    _
  $region19: #{encoder_forward.5} parent=0 // pred_check_branch
    %477 = sbr.rel (0) target = $region21
  $region20: #{encoder_forward.5} parent=0 // pred_region
    _
  $region21: #{encoder_forward.5} parent=0 // pred_fallthru
    _
  // Predicated region
  $region22: #{encoder_forward.5} parent=0 // pred_check
    _
  $region23: #{encoder_forward.5} parent=0 // pred_check_branch
    %479 = sbr.rel (0) target = $region25
  $region24: #{encoder_forward.5} parent=0 // pred_region
    _
  $region25: #{encoder_forward.5} parent=0 // pred_fallthru
    _
  // Predicated region
  $region26: #{encoder_forward.5} parent=0 // pred_check
    _
  $region27: #{encoder_forward.5} parent=0 // pred_check_branch
    %481 = sbr.rel (0) target = $region29
  $region28: #{encoder_forward.5} parent=0 // pred_region
    _
  $region29: #{encoder_forward.5} parent=0 // pred_fallthru
    _
  // Predicated region
  $region30: #{encoder_forward.5} parent=0 // pred_check
    _
  $region31: #{encoder_forward.5} parent=0 // pred_check_branch
    %483 = sbr.rel (0) target = $region33
  $region32: #{encoder_forward.5} parent=0 // pred_region
    _
  $region33: #{encoder_forward.5} parent=0 // pred_fallthru
    _

// kernel: encoder_forward.6
$region0: #{encoder_forward.6}
  #allocation0 [shape = 'u32[]', space=smem, size = 0x4, offset = 0x4, fixed_abs, tag = 'smem constant byte address 0x4 - core index']
  #allocation1 [shape = 'u32[144,128]{1,0:T(1,128)}', space=vmem, size = 0x12000, scoped, tag = 'internal scratch']
  %s0 = inlined_call_operand.vmem [shape: bf16[8,256], index: 0, kind: input, shape index: {}]
  %s1 = inlined_call_operand.vmem [shape: f32[1,256], index: 1, kind: input, shape index: {}]
  %s2 = inlined_call_operand.vmem [shape: f32[1,256], index: 2, kind: input, shape index: {}]
  %s3 = inlined_call_operand.vmem [shape: bf16[256,128], index: 3, kind: input, shape index: {}]
  %s4 = inlined_call_operand.vmem [shape: bf16[8,128], index: 4, kind: output, shape index: {0}]
  %s5 = inlined_call_operand.vmem [shape: f32[8,128], index: 5, kind: output, shape index: {1}]
  %6 = xla_tuple %s4, %s5
  %s7 = sld [smem:[#allocation0]]
  $region34: #{encoder_forward.6} parent=0
    _
  %s9 = ssub.s32 1, %s7
  %s10 = scalar_select 0, %s9, %s7
  // Predicated region
  $region2: #{encoder_forward.6} parent=0 // pred_check
    _
  $region3: #{encoder_forward.6} parent=0 // pred_check_branch
    %12 = sbr.rel (0) target = $region5
  $region4: #{encoder_forward.6} parent=0 // pred_region
    _
  $region5: #{encoder_forward.6} parent=0 // pred_fallthru
    _
  // Predicated region
  $region6: #{encoder_forward.6} parent=0 // pred_check
    _
  $region7: #{encoder_forward.6} parent=0 // pred_check_branch
    %14 = sbr.rel (0) target = $region9
  $region8: #{encoder_forward.6} parent=0 // pred_region
    _
  $region9: #{encoder_forward.6} parent=0 // pred_fallthru
    _
  // Predicated region
  $region10: #{encoder_forward.6} parent=0 // pred_check
    _
  $region11: #{encoder_forward.6} parent=0 // pred_check_branch
    %16 = sbr.rel (0) target = $region13
  $region12: #{encoder_forward.6} parent=0 // pred_region
    _
  $region13: #{encoder_forward.6} parent=0 // pred_fallthru
    _
  // Predicated region
  $region14: #{encoder_forward.6} parent=0 // pred_check
    _
  $region15: #{encoder_forward.6} parent=0 // pred_check_branch
    %18 = sbr.rel (0) target = $region17
  $region16: #{encoder_forward.6} parent=0 // pred_region
    _
  $region17: #{encoder_forward.6} parent=0 // pred_fallthru
    _
  %v20 = vld [vmem:[%s0] sm:$0xff]
  %v21 = vunpack.c.l.bf16 %v20
  %v22 = vunpack.c.h.bf16 %v20
  %v23 = vld [vmem:[%s1] sm:$0x3]
  %v25 = vlaneseq
  %v26 = vshrl.u32 %v25, 7
  %v27 = vsub.s32 0, %v26
  %v28 = vrot.slane %v23, %v27
  %v29 = vlaneseq
  %v30 = vshrl.u32 %v29, 7
  %v31 = vsub.s32 1, %v30
  %v32 = vrot.slane %v23, %v31
  %v35 = vmul.f32 %v21, %v28
  %v36 = vmul.f32 %v22, %v32
  %v37 = vld [vmem:[%s2] sm:$0x3]
  %v39 = vlaneseq
  %v40 = vshrl.u32 %v39, 7
  %v41 = vsub.s32 0, %v40
  %v42 = vrot.slane %v37, %v41
  %v43 = vlaneseq
  %v44 = vshrl.u32 %v43, 7
  %v45 = vsub.s32 1, %v44
  %v46 = vrot.slane %v37, %v45
  %v49 = vadd.f32 %v35, %v42
  %v50 = vadd.f32 %v36, %v46
  %v51 = vmax.f32 %v49, 0.0
  %v52 = vmax.f32 %v50, 0.0
  %v53 = vpack.c.bf16 %v51, %v51
  %v54 = vpack.c.bf16 %v52, %v52
  %v55 = vld [vmem:[%s3] sm:$0xf]
  %v56 = vld [vmem:[%s3 + $0x4] sm:$0xf]
  %v57 = vld [vmem:[%s3 + $0x8] sm:$0xf]
  %v58 = vld [vmem:[%s3 + $0xc] sm:$0xf]
  %v59 = vld [vmem:[%s3 + $0x10] sm:$0xf]
  %v60 = vld [vmem:[%s3 + $0x14] sm:$0xf]
  %v61 = vld [vmem:[%s3 + $0x18] sm:$0xf]
  %v62 = vld [vmem:[%s3 + $0x1c] sm:$0xf]
  %v63 = vld [vmem:[%s3 + $0x20] sm:$0xf]
  %v64 = vld [vmem:[%s3 + $0x24] sm:$0xf]
  %v65 = vld [vmem:[%s3 + $0x28] sm:$0xf]
  %v66 = vld [vmem:[%s3 + $0x2c] sm:$0xf]
  %v67 = vld [vmem:[%s3 + $0x30] sm:$0xf]
  %v68 = vld [vmem:[%s3 + $0x34] sm:$0xf]
  %v69 = vld [vmem:[%s3 + $0x38] sm:$0xf]
  %v70 = vld [vmem:[%s3 + $0x3c] sm:$0xf]
  %v71 = vld [vmem:[%s3 + $0x40] sm:$0xf]
  %v72 = vld [vmem:[%s3 + $0x44] sm:$0xf]
  %v73 = vld [vmem:[%s3 + $0x48] sm:$0xf]
  %v74 = vld [vmem:[%s3 + $0x4c] sm:$0xf]
  %v75 = vld [vmem:[%s3 + $0x50] sm:$0xf]
  %v76 = vld [vmem:[%s3 + $0x54] sm:$0xf]
  %v77 = vld [vmem:[%s3 + $0x58] sm:$0xf]
  %v78 = vld [vmem:[%s3 + $0x5c] sm:$0xf]
  %v79 = vld [vmem:[%s3 + $0x60] sm:$0xf]
  %v80 = vld [vmem:[%s3 + $0x64] sm:$0xf]
  %v81 = vld [vmem:[%s3 + $0x68] sm:$0xf]
  %v82 = vld [vmem:[%s3 + $0x6c] sm:$0xf]
  %v83 = vld [vmem:[%s3 + $0x70] sm:$0xf]
  %v84 = vld [vmem:[%s3 + $0x74] sm:$0xf]
  %v85 = vld [vmem:[%s3 + $0x78] sm:$0xf]
  %v86 = vld [vmem:[%s3 + $0x7c] sm:$0xf]
  %v119 = vunpack.c.l.b16 %v55
  %v120 = vunpack.c.l.b16 %v56
  %v121 = vunpack.c.l.b16 %v57
  %v122 = vunpack.c.l.b16 %v58
  %v123 = vunpack.c.l.b16 %v59
  %v124 = vunpack.c.l.b16 %v60
  %v125 = vunpack.c.l.b16 %v61
  %v126 = vunpack.c.l.b16 %v62
  %v127 = vunpack.c.l.b16 %v63
  %v128 = vunpack.c.l.b16 %v64
  %v129 = vunpack.c.l.b16 %v65
  %v130 = vunpack.c.l.b16 %v66
  %v131 = vunpack.c.l.b16 %v67
  %v132 = vunpack.c.l.b16 %v68
  %v133 = vunpack.c.l.b16 %v69
  %v134 = vunpack.c.l.b16 %v70
  %v135 = vunpack.c.l.b16 %v71
  %v136 = vunpack.c.l.b16 %v72
  %v137 = vunpack.c.l.b16 %v73
  %v138 = vunpack.c.l.b16 %v74
  %v139 = vunpack.c.l.b16 %v75
  %v140 = vunpack.c.l.b16 %v76
  %v141 = vunpack.c.l.b16 %v77
  %v142 = vunpack.c.l.b16 %v78
  %v143 = vunpack.c.l.b16 %v79
  %v144 = vunpack.c.l.b16 %v80
  %v145 = vunpack.c.l.b16 %v81
  %v146 = vunpack.c.l.b16 %v82
  %v147 = vunpack.c.l.b16 %v83
  %v148 = vunpack.c.l.b16 %v84
  %v149 = vunpack.c.l.b16 %v85
  %v150 = vunpack.c.l.b16 %v86
  %v151 = vpack.c.b16 %v120, %v119
  %v152 = vpack.c.b16 %v122, %v121
  %v153 = vpack.c.b16 %v124, %v123
  %v154 = vpack.c.b16 %v126, %v125
  %v155 = vpack.c.b16 %v128, %v127
  %v156 = vpack.c.b16 %v130, %v129
  %v157 = vpack.c.b16 %v132, %v131
  %v158 = vpack.c.b16 %v134, %v133
  %v159 = vpack.c.b16 %v136, %v135
  %v160 = vpack.c.b16 %v138, %v137
  %v161 = vpack.c.b16 %v140, %v139
  %v162 = vpack.c.b16 %v142, %v141
  %v163 = vpack.c.b16 %v144, %v143
  %v164 = vpack.c.b16 %v146, %v145
  %v165 = vpack.c.b16 %v148, %v147
  %v166 = vpack.c.b16 %v150, %v149
  %183 = vmatprep.subr.bf16.mxu0 0
  %184 = vmatpush1.bf16.msra.mxu0 %v151
  %185 = vmatprep.subr.bf16.mxu0 0
  %186 = vmatpush1.bf16.msra.mxu0 %v152
  %187 = vmatprep.subr.bf16.mxu0 0
  %188 = vmatpush1.bf16.msra.mxu0 %v153
  %189 = vmatprep.subr.bf16.mxu0 0
  %190 = vmatpush1.bf16.msra.mxu0 %v154
  %191 = vmatprep.subr.bf16.mxu0 0
  %192 = vmatpush1.bf16.msra.mxu0 %v155
  %193 = vmatprep.subr.bf16.mxu0 0
  %194 = vmatpush1.bf16.msra.mxu0 %v156
  %195 = vmatprep.subr.bf16.mxu0 0
  %196 = vmatpush1.bf16.msra.mxu0 %v157
  %197 = vmatprep.subr.bf16.mxu0 0
  %198 = vmatpush1.bf16.msra.mxu0 %v158
  %199 = vmatprep.subr.bf16.mxu0 0
  %200 = vmatpush1.bf16.msra.mxu0 %v159
  %201 = vmatprep.subr.bf16.mxu0 0
  %202 = vmatpush1.bf16.msra.mxu0 %v160
  %203 = vmatprep.subr.bf16.mxu0 0
  %204 = vmatpush1.bf16.msra.mxu0 %v161
  %205 = vmatprep.subr.bf16.mxu0 0
  %206 = vmatpush1.bf16.msra.mxu0 %v162
  %207 = vmatprep.subr.bf16.mxu0 0
  %208 = vmatpush1.bf16.msra.mxu0 %v163
  %209 = vmatprep.subr.bf16.mxu0 0
  %210 = vmatpush1.bf16.msra.mxu0 %v164
  %211 = vmatprep.subr.bf16.mxu0 0
  %212 = vmatpush1.bf16.msra.mxu0 %v165
  %213 = vmatprep.subr.bf16.mxu0 0
  %214 = vmatpush1.bf16.msra.mxu0 %v166
  %215 = vmatprep.mubr.bf16.mxu0 %v54
  %216 = vmatmul.mubr.bf16.gmra.mrb[0].mxu0 %v53
  %v217 = vpop.f32.mrb[0].mxu0
  %v218 = vadd.f32 0.0, %v217
  %v219 = vpop.f32.mrb[0].mxu0
  %v220 = vpop.f32.mrb[0].mxu0
  %v221 = vpop.f32.mrb[0].mxu0
  %222 = vdwg.mxu0
  %v223 = vpack.c.bf16 %v218, %v218
  %224 = vst [vmem:[%s4] sm:$0xf] %v223
  %v225 = vrot.slane %v218, 4
  %v226 = vadd.f32 %v218, %v225
  %v227 = vrot.slane %v226, 2
  %v228 = vadd.f32 %v226, %v227
  %v229 = vrot.slane %v228, 1
  %v230 = vadd.f32 %v228, %v229
  %v231 = vmul.f32 %v218, %v218
  %v232 = vrot.slane %v231, 4
  %v233 = vadd.f32 %v231, %v232
  %v234 = vrot.slane %v233, 2
  %v235 = vadd.f32 %v233, %v234
  %v236 = vrot.slane %v235, 1
  %v237 = vadd.f32 %v235, %v236
  %v238 = vlaneseq
  %v239 = vshrl.u32 %v238, 7
  %vm240 = vcmp.eq.s32.totalorder %v239, 0
  %v241 = vsel %vm240, %v230, 0.0
  %vm242 = vcmp.eq.s32.totalorder %v239, 1
  %v243 = vsel %vm242, %v237, 0.0
  %v244 = vadd.f32 %v241, %v243
  %245 = vst [vmem:[%s5] sm:$0xff] %v244
  // Predicated region
  $region18: #{encoder_forward.6} parent=0 // pred_check
    _
  $region19: #{encoder_forward.6} parent=0 // pred_check_branch
    %247 = sbr.rel (0) target = $region21
  $region20: #{encoder_forward.6} parent=0 // pred_region
    _
  $region21: #{encoder_forward.6} parent=0 // pred_fallthru
    _
  // Predicated region
  $region22: #{encoder_forward.6} parent=0 // pred_check
    _
  $region23: #{encoder_forward.6} parent=0 // pred_check_branch
    %249 = sbr.rel (0) target = $region25
  $region24: #{encoder_forward.6} parent=0 // pred_region
    _
  $region25: #{encoder_forward.6} parent=0 // pred_fallthru
    _
  // Predicated region
  $region26: #{encoder_forward.6} parent=0 // pred_check
    _
  $region27: #{encoder_forward.6} parent=0 // pred_check_branch
    %251 = sbr.rel (0) target = $region29
  $region28: #{encoder_forward.6} parent=0 // pred_region
    _
  $region29: #{encoder_forward.6} parent=0 // pred_fallthru
    _
  // Predicated region
  $region30: #{encoder_forward.6} parent=0 // pred_check
    _
  $region31: #{encoder_forward.6} parent=0 // pred_check_branch
    %253 = sbr.rel (0) target = $region33
  $region32: #{encoder_forward.6} parent=0 // pred_region
    _
  $region33: #{encoder_forward.6} parent=0 // pred_fallthru
    _

</llo_original>
